<compile_context>
chip_gen: v6e
topology: v6e:2x2x1
jax: 0.10.0
libtpu: 0.0.40
codegen_flags: <defaults>
</compile_context>

<pallas_src>
import functools

import numpy as np
import jax
import jax.numpy as jnp
from jax import lax
from jax.experimental import pallas as pl
from jax.experimental.pallas import tpu as pltpu


# ------------------------------ Pallas kernel ------------------------------

def _yblock_kernel(x_ref, masks_ref, segs_ref,
                   w1_ref, t1_ref, w2_ref, t2_ref,
                   wse1_ref, bse1_ref, wse2t_ref, bse2_ref,
                   w3_ref, t3_ref,
                   o_ref, taps_ref, *, W, NL, Bt):
    """One grid step = Bt images. Layout (C, Bt*H*W): channels on sublanes, lanes dense."""
    L = Bt * NL
    Wb = w1_ref.shape[0]

    x = x_ref[...]                                        # (Cin, L) f32

    # ---- conv2d_bn_1: 1x1 conv; BN scale pre-folded into w1 rows -> shift + ReLU ----
    h1 = jnp.dot(w1_ref[...], x, preferred_element_type=jnp.float32)
    h1 = jnp.maximum(h1 + t1_ref[...], 0.0)               # (Wb, L)

    # ---- conv2d_bn_2: 3x3 'same' conv as ONE im2col matmul (K = 9*Wb) ----
    # Tap (kh,kw): value at flattened position p comes from p + (kh-1)*W + (kw-1),
    # realized as a lane rotation; lane-wrap / cross-image / spatial-boundary
    # positions are zeroed by precomputed masks.  Taps are written into a VMEM
    # scratch slice-by-slice (no concatenate) so XLU/VPU work overlaps the MXU.
    for kh in range(3):
        for kw in range(3):
            k = kh * 3 + kw
            off = (kh - 1) * W + (kw - 1)
            tap = h1 if off == 0 else pltpu.roll(h1, shift=(-off) % L, axis=1)
            if k != 4:                                     # center-tap mask is all ones
                tap = tap * masks_ref[k]                   # (Wb, L) * (1, L)
            taps_ref[k * Wb:(k + 1) * Wb, :] = tap
    h2 = jnp.dot(w2_ref[...], taps_ref[...], preferred_element_type=jnp.float32)
    h2 = jnp.maximum(h2 + t2_ref[...], 0.0)                # (Wb, L)

    # ---- SEBlock, segmented per image (VPU/EUP only, exact f32) ----
    inv_nl = 1.0 / NL
    gate_full = jnp.zeros_like(h2)
    for b in range(Bt):
        h2b = h2[:, b * NL:(b + 1) * NL]                                   # static lane slice
        pooled = jnp.sum(h2b, axis=1, keepdims=True) * inv_nl              # (Wb, 1)
        z = jnp.sum(wse1_ref[...] * pooled, axis=0, keepdims=True) + bse1_ref[...]
        z = jnp.maximum(z, 0.0)                                            # (1, hid)
        g = jnp.sum(wse2t_ref[...] * z, axis=1, keepdims=True) + bse2_ref[...]
        gate_full = gate_full + jax.nn.sigmoid(g) * segs_ref[b]            # scatter gate to image b
    h2g = h2 * gate_full

    # ---- conv2d_bn_3: 1x1 conv ----
    h3 = jnp.dot(w3_ref[...], h2g, preferred_element_type=jnp.float32)
    h3 = jnp.maximum(h3 + t3_ref[...], 0.0)

    # ---- residual: stride=1 => spatial unchanged => identity = input ----
    o_ref[...] = h3 + x


# ------------------------------- wrapper ------------------------------------

def _make_masks(H, W):
    """(9, 1, H*W) validity masks for the 9 taps of a 3x3 'same' conv."""
    m = np.zeros((9, 1, H * W), np.float32)
    for kh in range(3):
        for kw in range(3):
            k = kh * 3 + kw
            for i in range(H):
                if not (0 <= i + kh - 1 < H):
                    continue
                for j in range(W):
                    if 0 <= j + kw - 1 < W:
                        m[k, 0, i * W + j] = 1.0
    return m


def yblock_forward(x_nchw, kp, *, imgs_per_step=None):
    B, Cin, H, W = x_nchw.shape
    NL = H * W
    Cout = kp['w3f'].shape[0]
    Wb = kp['w1f'].shape[0]
    assert Cin == Cout, "stride=1 residual path requires in_channels == block_width"

    if imgs_per_step is None:
        # Fuse the whole (tiny) batch when B<=2; otherwise fuse pairs so that
        # v7x's two TensorCores still get >=2 "parallel" grid steps.
        imgs_per_step = B if B <= 2 else 2
    assert B % imgs_per_step == 0
    Bt = imgs_per_step
    steps = B // Bt
    L = Bt * NL

    # Channels on sublanes, images concatenated along the lane axis.
    x_cl = jnp.transpose(x_nchw.reshape(B, Cin, NL), (1, 0, 2)).reshape(Cin, B * NL)

    masks = jnp.asarray(np.tile(_make_masks(H, W), (1, 1, Bt)))        # (9, 1, L)
    segs_np = np.zeros((Bt, 1, L), np.float32)
    for b in range(Bt):
        segs_np[b, 0, b * NL:(b + 1) * NL] = 1.0                       # per-image lane indicator
    segs = jnp.asarray(segs_np)

    order = ['w1f', 't1', 'w2f', 't2', 'wse1', 'bse1', 'wse2t', 'bse2', 'w3f', 't3']
    weights = [kp[name] for name in order]

    def const_spec(arr):   # full-array block, constant index -> resident in VMEM
        n = arr.ndim
        return pl.BlockSpec(arr.shape, lambda s, n=n: (0,) * n)

    flops = 2 * (Cin * Wb + 9 * Wb * Wb + Wb * Cout) * NL * B
    bytes_accessed = 4 * (x_cl.size + Cout * B * NL + masks.size + segs.size
                          + sum(int(w.size) for w in weights))
    cost = pl.CostEstimate(flops=int(flops), transcendentals=int(Wb * B),
                           bytes_accessed=int(bytes_accessed))

    out_flat = pl.pallas_call(
        functools.partial(_yblock_kernel, W=W, NL=NL, Bt=Bt),
        out_shape=jax.ShapeDtypeStruct((Cout, B * NL), jnp.float32),
        grid=(steps,),
        in_specs=[pl.BlockSpec((Cin, L), lambda s: (0, s)),
                  const_spec(masks), const_spec(segs)]
                 + [const_spec(w) for w in weights],
        out_specs=pl.BlockSpec((Cout, L), lambda s: (0, s)),
        scratch_shapes=[pltpu.VMEM((9 * Wb, L), jnp.float32)],
        compiler_params=pltpu.CompilerParams(dimension_semantics=("parallel",)),
        cost_estimate=cost,
    )(x_cl, masks, segs, *weights)

    return out_flat.reshape(Cout, B, NL).transpose(1, 0, 2).reshape(B, Cout, H, W)


# ------------------------- parameter construction ---------------------------

def fold_bn(conv_bias, gamma, beta, mean, var, eps=1e-5):
    s = gamma / jnp.sqrt(var + eps)
    t = s * (conv_bias - mean) + beta
    return s.astype(jnp.float32), t.astype(jnp.float32)


def make_conv_bn(key, w_shape, cout, scale=0.1):
    kw, kb, kg, kbe, km, kv = jax.random.split(key, 6)
    w = jax.random.normal(kw, w_shape, jnp.float32) * scale
    b = jax.random.normal(kb, (cout,), jnp.float32) * scale
    gamma = 1.0 + 0.1 * jax.random.normal(kg, (cout,), jnp.float32)
    beta = 0.1 * jax.random.normal(kbe, (cout,), jnp.float32)
    mean = 0.1 * jax.random.normal(km, (cout,), jnp.float32)
    var = jnp.abs(jax.random.normal(kv, (cout,), jnp.float32)) + 0.5
    s, t = fold_bn(b, gamma, beta, mean, var)
    return w, s, t


def pack_kernel_params(p):
    """Host-side packing: transpose, im2col weight layout, fold BN scale into weights."""
    f32 = jnp.float32
    Wb = p['w1'].shape[1]
    col = lambda v: v.reshape(-1, 1).astype(f32)
    row = lambda v: v.reshape(1, -1).astype(f32)
    # OIHW -> (O, kh, kw, I) -> (Wb, 9*Wb); column index = (kh*3+kw)*Wb + cin
    w2k = jnp.transpose(p['w2'], (0, 2, 3, 1)).reshape(Wb, -1)
    return dict(
        w1f=(p['s1'][:, None] * jnp.transpose(p['w1'])).astype(f32),     # (Wb, Cin), scale folded
        t1=col(p['t1']),
        w2f=(p['s2'][:, None] * w2k).astype(f32),                        # (Wb, 9*Wb), scale folded
        t2=col(p['t2']),
        wse1=p['wse1'].astype(f32),                                      # (Wb, hid)
        bse1=row(p['bse1']),                                             # (1, hid)
        wse2t=jnp.transpose(p['wse2']).astype(f32),                      # (Wb, hid)
        bse2=col(p['bse2']),                                             # (Wb, 1)
        w3f=(p['s3'][:, None] * jnp.transpose(p['w3'])).astype(f32),     # (Cout, Wb), scale folded
        t3=col(p['t3']),
    )


# ----------------------------- JAX reference --------------------------------

def yblock_reference(x_nchw, p):
    def bnact(y, s, t):
        return jnp.maximum(y * s.reshape(1, -1, 1, 1) + t.reshape(1, -1, 1, 1), 0.0)

    h1 = bnact(jnp.einsum('bchw,cd->bdhw', x_nchw, p['w1']), p['s1'], p['t1'])
    h2 = bnact(lax.conv_general_dilated(
        h1, p['w2'], window_strides=(1, 1), padding='SAME',
        dimension_numbers=('NCHW', 'OIHW', 'NCHW')), p['s2'], p['t2'])
    pooled = jnp.mean(h2, axis=(2, 3))                                   # (B, Wb)
    z = jnp.maximum(jnp.dot(pooled, p['wse1']) + p['bse1'], 0.0)
    gate = jax.nn.sigmoid(jnp.dot(z, p['wse2']) + p['bse2'])
    h2 = h2 * gate[:, :, None, None]
    h3 = bnact(jnp.einsum('bchw,cd->bdhw', h2, p['w3']), p['s3'], p['t3'])
    return h3 + x_nchw


# --------------------------------- main --------------------------------------

if __name__ == "__main__":
    key = jax.random.PRNGKey(0)
    B, Cin, H, W = 2, 32, 16, 16
    block_width = 32          # must equal Cin for the stride=1 residual path
    bottleneck_ratio = 2
    Wb = block_width // bottleneck_ratio          # 16
    se_hidden = max(Wb // 4, 1)                   # SEBlock bottleneck_ratio=4 -> 4

    keys = jax.random.split(key, 8)
    x_nchw = jax.random.normal(keys[0], (B, Cin, H, W), jnp.float32)

    w1, s1, t1 = make_conv_bn(keys[1], (Cin, Wb), Wb)
    w2, s2, t2 = make_conv_bn(keys[2], (Wb, Wb, 3, 3), Wb)            # OIHW
    w3, s3, t3 = make_conv_bn(keys[3], (Wb, block_width), block_width)
    wse1 = jax.random.normal(keys[4], (Wb, se_hidden), jnp.float32) * 0.1
    bse1 = jax.random.normal(keys[5], (se_hidden,), jnp.float32) * 0.1
    wse2 = jax.random.normal(keys[6], (se_hidden, Wb), jnp.float32) * 0.1
    bse2 = jax.random.normal(keys[7], (Wb,), jnp.float32) * 0.1

    params = dict(w1=w1, s1=s1, t1=t1, w2=w2, s2=s2, t2=t2,
                  w3=w3, s3=s3, t3=t3,
                  wse1=wse1, bse1=bse1, wse2=wse2, bse2=bse2)
    kp = pack_kernel_params(params)

    out = jax.block_until_ready(yblock_forward(x_nchw, kp))
    ref = jax.block_until_ready(yblock_reference(x_nchw, params))

    # Both sides are f32; residual divergence comes only from summation order /
    # folded-scale reassociation (and single-pass MXU rounding on real TPU).
    if not np.allclose(np.asarray(out), np.asarray(ref), rtol=5e-3, atol=5e-3):
        err = float(np.max(np.abs(np.asarray(out) - np.asarray(ref))))
        raise AssertionError(
            f"Pallas YBlock output mismatch vs JAX reference (max abs err {err})")
    print("KERNEL_OK")
</pallas_src>

<mosaic_0001>
module attributes {stable_mosaic.version = 11 : i64} {
  func.func @_yblock_kernel(%arg0: i32, %arg1: memref<32x512xf32, #tpu.memory_space<vmem>>, %arg2: memref<9x1x512xf32, #tpu.memory_space<vmem>>, %arg3: memref<2x1x512xf32, #tpu.memory_space<vmem>>, %arg4: memref<16x32xf32, #tpu.memory_space<vmem>>, %arg5: memref<16x1xf32, #tpu.memory_space<vmem>>, %arg6: memref<16x144xf32, #tpu.memory_space<vmem>>, %arg7: memref<16x1xf32, #tpu.memory_space<vmem>>, %arg8: memref<16x4xf32, #tpu.memory_space<vmem>>, %arg9: memref<1x4xf32, #tpu.memory_space<vmem>>, %arg10: memref<16x4xf32, #tpu.memory_space<vmem>>, %arg11: memref<16x1xf32, #tpu.memory_space<vmem>>, %arg12: memref<32x16xf32, #tpu.memory_space<vmem>>, %arg13: memref<32x1xf32, #tpu.memory_space<vmem>>, %arg14: memref<32x512xf32, #tpu.memory_space<vmem>>, %arg15: memref<144x512xf32, #tpu.memory_space<vmem>>) attributes {dimension_semantics = [#tpu.dimension_semantics<parallel>], iteration_bounds = array<i64: 1>, scalar_prefetch = 0 : i64, scratch_operands = 1 : i64, tpu.core_type = #tpu.core_type<tc>, window_params = [{transform_indices = @transform_0, window_bounds = array<i64: 32, 512>}, {pipeline_mode = #tpu.pipeline_mode<synchronous>, transform_indices = @transform_1, window_bounds = array<i64: 9, 1, 512>}, {pipeline_mode = #tpu.pipeline_mode<synchronous>, transform_indices = @transform_2, window_bounds = array<i64: 2, 1, 512>}, {pipeline_mode = #tpu.pipeline_mode<synchronous>, transform_indices = @transform_3, window_bounds = array<i64: 16, 32>}, {pipeline_mode = #tpu.pipeline_mode<synchronous>, transform_indices = @transform_4, window_bounds = array<i64: 16, 1>}, {pipeline_mode = #tpu.pipeline_mode<synchronous>, transform_indices = @transform_5, window_bounds = array<i64: 16, 144>}, {pipeline_mode = #tpu.pipeline_mode<synchronous>, transform_indices = @transform_6, window_bounds = array<i64: 16, 1>}, {pipeline_mode = #tpu.pipeline_mode<synchronous>, transform_indices = @transform_7, window_bounds = array<i64: 16, 4>}, {pipeline_mode = #tpu.pipeline_mode<synchronous>, transform_indices = @transform_8, window_bounds = array<i64: 1, 4>}, {pipeline_mode = #tpu.pipeline_mode<synchronous>, transform_indices = @transform_9, window_bounds = array<i64: 16, 4>}, {pipeline_mode = #tpu.pipeline_mode<synchronous>, transform_indices = @transform_10, window_bounds = array<i64: 16, 1>}, {pipeline_mode = #tpu.pipeline_mode<synchronous>, transform_indices = @transform_11, window_bounds = array<i64: 32, 16>}, {pipeline_mode = #tpu.pipeline_mode<synchronous>, transform_indices = @transform_12, window_bounds = array<i64: 32, 1>}, {transform_indices = @transform_13, window_bounds = array<i64: 32, 512>}]} {
    %c0 = arith.constant 0 : index
    %c0_0 = arith.constant 0 : index
    %0 = vector.load %arg1[%c0, %c0_0] : memref<32x512xf32, #tpu.memory_space<vmem>>, vector<32x512xf32>
    %c0_1 = arith.constant 0 : index
    %c0_2 = arith.constant 0 : index
    %1 = vector.load %arg4[%c0_1, %c0_2] : memref<16x32xf32, #tpu.memory_space<vmem>>, vector<16x32xf32>
    %cst = arith.constant dense<0.000000e+00> : vector<16x512xf32>
    %2 = tpu.matmul %1, %0, %cst {dimension_numbers = #tpu.dot_dimension_numbers<[1], [0], [0], [1], [0, 0, 1, 1], [], []>} : vector<16x32xf32>, vector<32x512xf32>, vector<16x512xf32> -> vector<16x512xf32>
    %c0_3 = arith.constant 0 : index
    %c0_4 = arith.constant 0 : index
    %3 = vector.load %arg5[%c0_3, %c0_4] : memref<16x1xf32, #tpu.memory_space<vmem>>, vector<16x1xf32>
    %4 = vector.broadcast %3 : vector<16x1xf32> to vector<16x512xf32>
    %5 = arith.addf %2, %4 : vector<16x512xf32>
    %cst_5 = arith.constant 0.000000e+00 : f32
    %6 = vector.broadcast %cst_5 : f32 to vector<16x512xf32>
    %7 = arith.maximumf %5, %6 : vector<16x512xf32>
    %c17_i32 = arith.constant 17 : i32
    %8 = tpu.dynamic_rotate %7 by %c17_i32 dim 1 : vector<16x512xf32>, i32 -> vector<16x512xf32>
    %c0_6 = arith.constant 0 : index
    %c0_7 = arith.constant 0 : index
    %c0_8 = arith.constant 0 : index
    %9 = vector.load %arg2[%c0_6, %c0_7, %c0_8] : memref<9x1x512xf32, #tpu.memory_space<vmem>>, vector<1x1x512xf32>
    %10 = vector.shape_cast %9 : vector<1x1x512xf32> to vector<1x512xf32>
    %11 = vector.broadcast %10 : vector<1x512xf32> to vector<16x512xf32>
    %12 = arith.mulf %8, %11 : vector<16x512xf32>
    %c0_9 = arith.constant 0 : index
    %c0_10 = arith.constant 0 : index
    %13 = vector.load %arg15[%c0_9, %c0_10] : memref<144x512xf32, #tpu.memory_space<vmem>>, vector<16x512xf32>
    tpu.vector_store %arg15[%c0_9, %c0_10], %12 {strides = array<i32>} : memref<144x512xf32, #tpu.memory_space<vmem>>, vector<16x512xf32>,
    %c16_i32 = arith.constant 16 : i32
    %14 = tpu.dynamic_rotate %7 by %c16_i32 dim 1 : vector<16x512xf32>, i32 -> vector<16x512xf32>
    %c1 = arith.constant 1 : index
    %c0_11 = arith.constant 0 : index
    %c0_12 = arith.constant 0 : index
    %15 = vector.load %arg2[%c1, %c0_11, %c0_12] : memref<9x1x512xf32, #tpu.memory_space<vmem>>, vector<1x1x512xf32>
    %16 = vector.shape_cast %15 : vector<1x1x512xf32> to vector<1x512xf32>
    %17 = vector.broadcast %16 : vector<1x512xf32> to vector<16x512xf32>
    %18 = arith.mulf %14, %17 : vector<16x512xf32>
    %c16 = arith.constant 16 : index
    %c0_13 = arith.constant 0 : index
    %19 = vector.load %arg15[%c16, %c0_13] : memref<144x512xf32, #tpu.memory_space<vmem>>, vector<16x512xf32>
    tpu.vector_store %arg15[%c16, %c0_13], %18 {strides = array<i32>} : memref<144x512xf32, #tpu.memory_space<vmem>>, vector<16x512xf32>,
    %c15_i32 = arith.constant 15 : i32
    %20 = tpu.dynamic_rotate %7 by %c15_i32 dim 1 : vector<16x512xf32>, i32 -> vector<16x512xf32>
    %c2 = arith.constant 2 : index
    %c0_14 = arith.constant 0 : index
    %c0_15 = arith.constant 0 : index
    %21 = vector.load %arg2[%c2, %c0_14, %c0_15] : memref<9x1x512xf32, #tpu.memory_space<vmem>>, vector<1x1x512xf32>
    %22 = vector.shape_cast %21 : vector<1x1x512xf32> to vector<1x512xf32>
    %23 = vector.broadcast %22 : vector<1x512xf32> to vector<16x512xf32>
    %24 = arith.mulf %20, %23 : vector<16x512xf32>
    %c32 = arith.constant 32 : index
    %c0_16 = arith.constant 0 : index
    %25 = vector.load %arg15[%c32, %c0_16] : memref<144x512xf32, #tpu.memory_space<vmem>>, vector<16x512xf32>
    tpu.vector_store %arg15[%c32, %c0_16], %24 {strides = array<i32>} : memref<144x512xf32, #tpu.memory_space<vmem>>, vector<16x512xf32>,
    %c1_i32 = arith.constant 1 : i32
    %26 = tpu.dynamic_rotate %7 by %c1_i32 dim 1 : vector<16x512xf32>, i32 -> vector<16x512xf32>
    %c3 = arith.constant 3 : index
    %c0_17 = arith.constant 0 : index
    %c0_18 = arith.constant 0 : index
    %27 = vector.load %arg2[%c3, %c0_17, %c0_18] : memref<9x1x512xf32, #tpu.memory_space<vmem>>, vector<1x1x512xf32>
    %28 = vector.shape_cast %27 : vector<1x1x512xf32> to vector<1x512xf32>
    %29 = vector.broadcast %28 : vector<1x512xf32> to vector<16x512xf32>
    %30 = arith.mulf %26, %29 : vector<16x512xf32>
    %c48 = arith.constant 48 : index
    %c0_19 = arith.constant 0 : index
    %31 = vector.load %arg15[%c48, %c0_19] : memref<144x512xf32, #tpu.memory_space<vmem>>, vector<16x512xf32>
    tpu.vector_store %arg15[%c48, %c0_19], %30 {strides = array<i32>} : memref<144x512xf32, #tpu.memory_space<vmem>>, vector<16x512xf32>,
    %c64 = arith.constant 64 : index
    %c0_20 = arith.constant 0 : index
    %32 = vector.load %arg15[%c64, %c0_20] : memref<144x512xf32, #tpu.memory_space<vmem>>, vector<16x512xf32>
    tpu.vector_store %arg15[%c64, %c0_20], %7 {strides = array<i32>} : memref<144x512xf32, #tpu.memory_space<vmem>>, vector<16x512xf32>,
    %c511_i32 = arith.constant 511 : i32
    %33 = tpu.dynamic_rotate %7 by %c511_i32 dim 1 : vector<16x512xf32>, i32 -> vector<16x512xf32>
    %c5 = arith.constant 5 : index
    %c0_21 = arith.constant 0 : index
    %c0_22 = arith.constant 0 : index
    %34 = vector.load %arg2[%c5, %c0_21, %c0_22] : memref<9x1x512xf32, #tpu.memory_space<vmem>>, vector<1x1x512xf32>
    %35 = vector.shape_cast %34 : vector<1x1x512xf32> to vector<1x512xf32>
    %36 = vector.broadcast %35 : vector<1x512xf32> to vector<16x512xf32>
    %37 = arith.mulf %33, %36 : vector<16x512xf32>
    %c80 = arith.constant 80 : index
    %c0_23 = arith.constant 0 : index
    %38 = vector.load %arg15[%c80, %c0_23] : memref<144x512xf32, #tpu.memory_space<vmem>>, vector<16x512xf32>
    tpu.vector_store %arg15[%c80, %c0_23], %37 {strides = array<i32>} : memref<144x512xf32, #tpu.memory_space<vmem>>, vector<16x512xf32>,
    %c497_i32 = arith.constant 497 : i32
    %39 = tpu.dynamic_rotate %7 by %c497_i32 dim 1 : vector<16x512xf32>, i32 -> vector<16x512xf32>
    %c6 = arith.constant 6 : index
    %c0_24 = arith.constant 0 : index
    %c0_25 = arith.constant 0 : index
    %40 = vector.load %arg2[%c6, %c0_24, %c0_25] : memref<9x1x512xf32, #tpu.memory_space<vmem>>, vector<1x1x512xf32>
    %41 = vector.shape_cast %40 : vector<1x1x512xf32> to vector<1x512xf32>
    %42 = vector.broadcast %41 : vector<1x512xf32> to vector<16x512xf32>
    %43 = arith.mulf %39, %42 : vector<16x512xf32>
    %c96 = arith.constant 96 : index
    %c0_26 = arith.constant 0 : index
    %44 = vector.load %arg15[%c96, %c0_26] : memref<144x512xf32, #tpu.memory_space<vmem>>, vector<16x512xf32>
    tpu.vector_store %arg15[%c96, %c0_26], %43 {strides = array<i32>} : memref<144x512xf32, #tpu.memory_space<vmem>>, vector<16x512xf32>,
    %c496_i32 = arith.constant 496 : i32
    %45 = tpu.dynamic_rotate %7 by %c496_i32 dim 1 : vector<16x512xf32>, i32 -> vector<16x512xf32>
    %c7 = arith.constant 7 : index
    %c0_27 = arith.constant 0 : index
    %c0_28 = arith.constant 0 : index
    %46 = vector.load %arg2[%c7, %c0_27, %c0_28] : memref<9x1x512xf32, #tpu.memory_space<vmem>>, vector<1x1x512xf32>
    %47 = vector.shape_cast %46 : vector<1x1x512xf32> to vector<1x512xf32>
    %48 = vector.broadcast %47 : vector<1x512xf32> to vector<16x512xf32>
    %49 = arith.mulf %45, %48 : vector<16x512xf32>
    %c112 = arith.constant 112 : index
    %c0_29 = arith.constant 0 : index
    %50 = vector.load %arg15[%c112, %c0_29] : memref<144x512xf32, #tpu.memory_space<vmem>>, vector<16x512xf32>
    tpu.vector_store %arg15[%c112, %c0_29], %49 {strides = array<i32>} : memref<144x512xf32, #tpu.memory_space<vmem>>, vector<16x512xf32>,
    %c495_i32 = arith.constant 495 : i32
    %51 = tpu.dynamic_rotate %7 by %c495_i32 dim 1 : vector<16x512xf32>, i32 -> vector<16x512xf32>
    %c8 = arith.constant 8 : index
    %c0_30 = arith.constant 0 : index
    %c0_31 = arith.constant 0 : index
    %52 = vector.load %arg2[%c8, %c0_30, %c0_31] : memref<9x1x512xf32, #tpu.memory_space<vmem>>, vector<1x1x512xf32>
    %53 = vector.shape_cast %52 : vector<1x1x512xf32> to vector<1x512xf32>
    %54 = vector.broadcast %53 : vector<1x512xf32> to vector<16x512xf32>
    %55 = arith.mulf %51, %54 : vector<16x512xf32>
    %c128 = arith.constant 128 : index
    %c0_32 = arith.constant 0 : index
    %56 = vector.load %arg15[%c128, %c0_32] : memref<144x512xf32, #tpu.memory_space<vmem>>, vector<16x512xf32>
    tpu.vector_store %arg15[%c128, %c0_32], %55 {strides = array<i32>} : memref<144x512xf32, #tpu.memory_space<vmem>>, vector<16x512xf32>,
    %c0_33 = arith.constant 0 : index
    %c0_34 = arith.constant 0 : index
    %57 = vector.load %arg6[%c0_33, %c0_34] : memref<16x144xf32, #tpu.memory_space<vmem>>, vector<16x144xf32>
    %c0_35 = arith.constant 0 : index
    %c0_36 = arith.constant 0 : index
    %58 = vector.load %arg15[%c0_35, %c0_36] : memref<144x512xf32, #tpu.memory_space<vmem>>, vector<144x512xf32>
    %cst_37 = arith.constant dense<0.000000e+00> : vector<16x512xf32>
    %59 = tpu.matmul %57, %58, %cst_37 {dimension_numbers = #tpu.dot_dimension_numbers<[1], [0], [0], [1], [0, 0, 1, 1], [], []>} : vector<16x144xf32>, vector<144x512xf32>, vector<16x512xf32> -> vector<16x512xf32>
    %c0_38 = arith.constant 0 : index
    %c0_39 = arith.constant 0 : index
    %60 = vector.load %arg7[%c0_38, %c0_39] : memref<16x1xf32, #tpu.memory_space<vmem>>, vector<16x1xf32>
    %61 = vector.broadcast %60 : vector<16x1xf32> to vector<16x512xf32>
    %62 = arith.addf %59, %61 : vector<16x512xf32>
    %cst_40 = arith.constant 0.000000e+00 : f32
    %63 = vector.broadcast %cst_40 : f32 to vector<16x512xf32>
    %64 = arith.maximumf %62, %63 : vector<16x512xf32>
    %cst_41 = arith.constant 0.000000e+00 : f32
    %65 = vector.broadcast %cst_41 : f32 to vector<16x512xf32>
    %66 = vector.extract_strided_slice %64 {offsets = [0, 0], sizes = [16, 256], strides = [1, 1]} : vector<16x512xf32> to vector<16x256xf32>
    %cst_42 = arith.constant dense<0.000000e+00> : vector<16xf32>
    %67 = vector.multi_reduction <add>, %66, %cst_42 [1] : vector<16x256xf32> to vector<16xf32>
    %68 = vector.shape_cast %67 : vector<16xf32> to vector<16x1xf32>
    %cst_43 = arith.constant 3.906250e-03 : f32
    %69 = vector.broadcast %cst_43 : f32 to vector<16x1xf32>
    %70 = arith.mulf %68, %69 : vector<16x1xf32>
    %c0_44 = arith.constant 0 : index
    %c0_45 = arith.constant 0 : index
    %71 = vector.load %arg8[%c0_44, %c0_45] : memref<16x4xf32, #tpu.memory_space<vmem>>, vector<16x4xf32>
    %72 = vector.broadcast %70 : vector<16x1xf32> to vector<16x4xf32>
    %73 = arith.mulf %71, %72 : vector<16x4xf32>
    %cst_46 = arith.constant dense<0.000000e+00> : vector<4xf32>
    %74 = vector.multi_reduction <add>, %73, %cst_46 [0] : vector<16x4xf32> to vector<4xf32>
    %75 = vector.shape_cast %74 : vector<4xf32> to vector<1x4xf32>
    %c0_47 = arith.constant 0 : index
    %c0_48 = arith.constant 0 : index
    %76 = vector.load %arg9[%c0_47, %c0_48] : memref<1x4xf32, #tpu.memory_space<vmem>>, vector<1x4xf32>
    %77 = arith.addf %75, %76 : vector<1x4xf32>
    %cst_49 = arith.constant 0.000000e+00 : f32
    %78 = vector.broadcast %cst_49 : f32 to vector<1x4xf32>
    %79 = arith.maximumf %77, %78 : vector<1x4xf32>
    %c0_50 = arith.constant 0 : index
    %c0_51 = arith.constant 0 : index
    %80 = vector.load %arg10[%c0_50, %c0_51] : memref<16x4xf32, #tpu.memory_space<vmem>>, vector<16x4xf32>
    %81 = vector.broadcast %79 : vector<1x4xf32> to vector<16x4xf32>
    %82 = arith.mulf %80, %81 : vector<16x4xf32>
    %cst_52 = arith.constant dense<0.000000e+00> : vector<16xf32>
    %83 = vector.multi_reduction <add>, %82, %cst_52 [1] : vector<16x4xf32> to vector<16xf32>
    %84 = vector.shape_cast %83 : vector<16xf32> to vector<16x1xf32>
    %c0_53 = arith.constant 0 : index
    %c0_54 = arith.constant 0 : index
    %85 = vector.load %arg11[%c0_53, %c0_54] : memref<16x1xf32, #tpu.memory_space<vmem>>, vector<16x1xf32>
    %86 = arith.addf %84, %85 : vector<16x1xf32>
    %87 = arith.negf %86 : vector<16x1xf32>
    %88 = math.exp %87 : vector<16x1xf32>
    %cst_55 = arith.constant 1.000000e+00 : f32
    %89 = vector.broadcast %cst_55 : f32 to vector<16x1xf32>
    %90 = arith.addf %89, %88 : vector<16x1xf32>
    %91 = arith.divf %89, %90 : vector<16x1xf32>
    %c0_56 = arith.constant 0 : index
    %c0_57 = arith.constant 0 : index
    %c0_58 = arith.constant 0 : index
    %92 = vector.load %arg3[%c0_56, %c0_57, %c0_58] : memref<2x1x512xf32, #tpu.memory_space<vmem>>, vector<1x1x512xf32>
    %93 = vector.shape_cast %92 : vector<1x1x512xf32> to vector<1x512xf32>
    %94 = vector.broadcast %91 : vector<16x1xf32> to vector<16x512xf32>
    %95 = vector.broadcast %93 : vector<1x512xf32> to vector<16x512xf32>
    %96 = arith.mulf %94, %95 : vector<16x512xf32>
    %97 = arith.addf %65, %96 : vector<16x512xf32>
    %98 = vector.extract_strided_slice %64 {offsets = [0, 256], sizes = [16, 256], strides = [1, 1]} : vector<16x512xf32> to vector<16x256xf32>
    %cst_59 = arith.constant dense<0.000000e+00> : vector<16xf32>
    %99 = vector.multi_reduction <add>, %98, %cst_59 [1] : vector<16x256xf32> to vector<16xf32>
    %100 = vector.shape_cast %99 : vector<16xf32> to vector<16x1xf32>
    %cst_60 = arith.constant 3.906250e-03 : f32
    %101 = vector.broadcast %cst_60 : f32 to vector<16x1xf32>
    %102 = arith.mulf %100, %101 : vector<16x1xf32>
    %c0_61 = arith.constant 0 : index
    %c0_62 = arith.constant 0 : index
    %103 = vector.load %arg8[%c0_61, %c0_62] : memref<16x4xf32, #tpu.memory_space<vmem>>, vector<16x4xf32>
    %104 = vector.broadcast %102 : vector<16x1xf32> to vector<16x4xf32>
    %105 = arith.mulf %103, %104 : vector<16x4xf32>
    %cst_63 = arith.constant dense<0.000000e+00> : vector<4xf32>
    %106 = vector.multi_reduction <add>, %105, %cst_63 [0] : vector<16x4xf32> to vector<4xf32>
    %107 = vector.shape_cast %106 : vector<4xf32> to vector<1x4xf32>
    %c0_64 = arith.constant 0 : index
    %c0_65 = arith.constant 0 : index
    %108 = vector.load %arg9[%c0_64, %c0_65] : memref<1x4xf32, #tpu.memory_space<vmem>>, vector<1x4xf32>
    %109 = arith.addf %107, %108 : vector<1x4xf32>
    %cst_66 = arith.constant 0.000000e+00 : f32
    %110 = vector.broadcast %cst_66 : f32 to vector<1x4xf32>
    %111 = arith.maximumf %109, %110 : vector<1x4xf32>
    %c0_67 = arith.constant 0 : index
    %c0_68 = arith.constant 0 : index
    %112 = vector.load %arg10[%c0_67, %c0_68] : memref<16x4xf32, #tpu.memory_space<vmem>>, vector<16x4xf32>
    %113 = vector.broadcast %111 : vector<1x4xf32> to vector<16x4xf32>
    %114 = arith.mulf %112, %113 : vector<16x4xf32>
    %cst_69 = arith.constant dense<0.000000e+00> : vector<16xf32>
    %115 = vector.multi_reduction <add>, %114, %cst_69 [1] : vector<16x4xf32> to vector<16xf32>
    %116 = vector.shape_cast %115 : vector<16xf32> to vector<16x1xf32>
    %c0_70 = arith.constant 0 : index
    %c0_71 = arith.constant 0 : index
    %117 = vector.load %arg11[%c0_70, %c0_71] : memref<16x1xf32, #tpu.memory_space<vmem>>, vector<16x1xf32>
    %118 = arith.addf %116, %117 : vector<16x1xf32>
    %119 = arith.negf %118 : vector<16x1xf32>
    %120 = math.exp %119 : vector<16x1xf32>
    %cst_72 = arith.constant 1.000000e+00 : f32
    %121 = vector.broadcast %cst_72 : f32 to vector<16x1xf32>
    %122 = arith.addf %121, %120 : vector<16x1xf32>
    %123 = arith.divf %121, %122 : vector<16x1xf32>
    %c1_73 = arith.constant 1 : index
    %c0_74 = arith.constant 0 : index
    %c0_75 = arith.constant 0 : index
    %124 = vector.load %arg3[%c1_73, %c0_74, %c0_75] : memref<2x1x512xf32, #tpu.memory_space<vmem>>, vector<1x1x512xf32>
    %125 = vector.shape_cast %124 : vector<1x1x512xf32> to vector<1x512xf32>
    %126 = vector.broadcast %123 : vector<16x1xf32> to vector<16x512xf32>
    %127 = vector.broadcast %125 : vector<1x512xf32> to vector<16x512xf32>
    %128 = arith.mulf %126, %127 : vector<16x512xf32>
    %129 = arith.addf %97, %128 : vector<16x512xf32>
    %130 = arith.mulf %64, %129 : vector<16x512xf32>
    %c0_76 = arith.constant 0 : index
    %c0_77 = arith.constant 0 : index
    %131 = vector.load %arg12[%c0_76, %c0_77] : memref<32x16xf32, #tpu.memory_space<vmem>>, vector<32x16xf32>
    %cst_78 = arith.constant dense<0.000000e+00> : vector<32x512xf32>
    %132 = tpu.matmul %131, %130, %cst_78 {dimension_numbers = #tpu.dot_dimension_numbers<[1], [0], [0], [1], [0, 0, 1, 1], [], []>} : vector<32x16xf32>, vector<16x512xf32>, vector<32x512xf32> -> vector<32x512xf32>
    %c0_79 = arith.constant 0 : index
    %c0_80 = arith.constant 0 : index
    %133 = vector.load %arg13[%c0_79, %c0_80] : memref<32x1xf32, #tpu.memory_space<vmem>>, vector<32x1xf32>
    %134 = vector.broadcast %133 : vector<32x1xf32> to vector<32x512xf32>
    %135 = arith.addf %132, %134 : vector<32x512xf32>
    %cst_81 = arith.constant 0.000000e+00 : f32
    %136 = vector.broadcast %cst_81 : f32 to vector<32x512xf32>
    %137 = arith.maximumf %135, %136 : vector<32x512xf32>
    %138 = arith.addf %137, %0 : vector<32x512xf32>
    %c0_82 = arith.constant 0 : index
    %c0_83 = arith.constant 0 : index
    %139 = vector.load %arg14[%c0_82, %c0_83] : memref<32x512xf32, #tpu.memory_space<vmem>>, vector<32x512xf32>
    tpu.vector_store %arg14[%c0_82, %c0_83], %138 {strides = array<i32>} : memref<32x512xf32, #tpu.memory_space<vmem>>, vector<32x512xf32>,
    return
  }
  func.func @transform_0(%arg0: i32) -> (i32, i32) {
    %c0_i32 = arith.constant 0 : i32
    %c0_i32_0 = arith.constant 0 : i32
    return %c0_i32, %arg0 : i32, i32
  }
  func.func @transform_1(%arg0: i32) -> (i32, i32, i32) {
    %c0_i32 = arith.constant 0 : i32
    %c0_i32_0 = arith.constant 0 : i32
    %c0_i32_1 = arith.constant 0 : i32
    %c0_i32_2 = arith.constant 0 : i32
    return %c0_i32, %c0_i32_0, %c0_i32_1 : i32, i32, i32
  }
  func.func @transform_2(%arg0: i32) -> (i32, i32, i32) {
    %c0_i32 = arith.constant 0 : i32
    %c0_i32_0 = arith.constant 0 : i32
    %c0_i32_1 = arith.constant 0 : i32
    %c0_i32_2 = arith.constant 0 : i32
    return %c0_i32, %c0_i32_0, %c0_i32_1 : i32, i32, i32
  }
  func.func @transform_3(%arg0: i32) -> (i32, i32) {
    %c0_i32 = arith.constant 0 : i32
    %c0_i32_0 = arith.constant 0 : i32
    %c0_i32_1 = arith.constant 0 : i32
    return %c0_i32, %c0_i32_0 : i32, i32
  }
  func.func @transform_4(%arg0: i32) -> (i32, i32) {
    %c0_i32 = arith.constant 0 : i32
    %c0_i32_0 = arith.constant 0 : i32
    %c0_i32_1 = arith.constant 0 : i32
    return %c0_i32, %c0_i32_0 : i32, i32
  }
  func.func @transform_5(%arg0: i32) -> (i32, i32) {
    %c0_i32 = arith.constant 0 : i32
    %c0_i32_0 = arith.constant 0 : i32
    %c0_i32_1 = arith.constant 0 : i32
    return %c0_i32, %c0_i32_0 : i32, i32
  }
  func.func @transform_6(%arg0: i32) -> (i32, i32) {
    %c0_i32 = arith.constant 0 : i32
    %c0_i32_0 = arith.constant 0 : i32
    %c0_i32_1 = arith.constant 0 : i32
    return %c0_i32, %c0_i32_0 : i32, i32
  }
  func.func @transform_7(%arg0: i32) -> (i32, i32) {
    %c0_i32 = arith.constant 0 : i32
    %c0_i32_0 = arith.constant 0 : i32
    %c0_i32_1 = arith.constant 0 : i32
    return %c0_i32, %c0_i32_0 : i32, i32
  }
  func.func @transform_8(%arg0: i32) -> (i32, i32) {
    %c0_i32 = arith.constant 0 : i32
    %c0_i32_0 = arith.constant 0 : i32
    %c0_i32_1 = arith.constant 0 : i32
    return %c0_i32, %c0_i32_0 : i32, i32
  }
  func.func @transform_9(%arg0: i32) -> (i32, i32) {
    %c0_i32 = arith.constant 0 : i32
    %c0_i32_0 = arith.constant 0 : i32
    %c0_i32_1 = arith.constant 0 : i32
    return %c0_i32, %c0_i32_0 : i32, i32
  }
  func.func @transform_10(%arg0: i32) -> (i32, i32) {
    %c0_i32 = arith.constant 0 : i32
    %c0_i32_0 = arith.constant 0 : i32
    %c0_i32_1 = arith.constant 0 : i32
    return %c0_i32, %c0_i32_0 : i32, i32
  }
  func.func @transform_11(%arg0: i32) -> (i32, i32) {
    %c0_i32 = arith.constant 0 : i32
    %c0_i32_0 = arith.constant 0 : i32
    %c0_i32_1 = arith.constant 0 : i32
    return %c0_i32, %c0_i32_0 : i32, i32
  }
  func.func @transform_12(%arg0: i32) -> (i32, i32) {
    %c0_i32 = arith.constant 0 : i32
    %c0_i32_0 = arith.constant 0 : i32
    %c0_i32_1 = arith.constant 0 : i32
    return %c0_i32, %c0_i32_0 : i32, i32
  }
  func.func @transform_13(%arg0: i32) -> (i32, i32) {
    %c0_i32 = arith.constant 0 : i32
    %c0_i32_0 = arith.constant 0 : i32
    return %c0_i32, %arg0 : i32, i32
  }
}

</mosaic_0001>

<llo_original>
// kernel: tpu_custom_call.1
$region0: #{tpu_custom_call.1}
  #allocation0 [shape = 'u32[]', space=smem, size = 0x4, offset = 0x4, fixed_abs, tag = 'smem constant byte address 0x4 - core index']
  #allocation1 [shape = 'u32[144,128]{1,0:T(1,128)}', space=vmem, size = 0x12000, scoped, tag = 'internal scratch']
  #allocation2 [shape = 'f32[144,512]{1,0:T(8,128)}', space=vmem, size = 0x48000, scoped, tag = 'scratch operand']
  %s0 = inlined_call_operand.vmem [shape: f32[32,512], index: 0, kind: input, shape index: {}]
  %s1 = inlined_call_operand.vmem [shape: f32[9,1,512], index: 1, kind: input, shape index: {}]
  %s2 = inlined_call_operand.hbm [shape: f32[2,1,512], index: 2, kind: input, shape index: {}]
  %s3 = inlined_call_operand.hbm [shape: f32[16,32], index: 3, kind: input, shape index: {}]
  %s4 = inlined_call_operand.vmem [shape: f32[16,1], index: 4, kind: input, shape index: {}]
  %s5 = inlined_call_operand.hbm [shape: f32[16,144], index: 5, kind: input, shape index: {}]
  %s6 = inlined_call_operand.vmem [shape: f32[16,1], index: 6, kind: input, shape index: {}]
  %s7 = inlined_call_operand.vmem [shape: f32[16,4], index: 7, kind: input, shape index: {}]
  %s8 = inlined_call_operand.hbm [shape: f32[1,4], index: 8, kind: input, shape index: {}]
  %s9 = inlined_call_operand.vmem [shape: f32[16,4], index: 9, kind: input, shape index: {}]
  %s10 = inlined_call_operand.vmem [shape: f32[16,1], index: 10, kind: input, shape index: {}]
  %s11 = inlined_call_operand.vmem [shape: f32[32,16], index: 11, kind: input, shape index: {}]
  %s12 = inlined_call_operand.vmem [shape: f32[32,1], index: 12, kind: input, shape index: {}]
  %s13 = inlined_call_operand.hbm [shape: f32[32,512], index: 13, kind: output, shape index: {}]
  %s14 = sld [smem:[#allocation0]]
  $region78: #{tpu_custom_call.1} parent=0
    _
  %s16 = ssub.s32 1, %s14
  %s17 = scalar_select 0, %s16, %s14
  $region1: #{tpu_custom_call.1} parent=0
    #allocation3 [shape = 'u8[4096]{0}', space=vmem, size = 0x1000, scoped, tag = 'input window, operand 2, single buffered']
    #allocation4 [shape = 's32[1]{0}', space=sflag, size = 0x4, scoped, tag = 'scoped memory for tpu_custom_call.1']
    #allocation5 [shape = 's32[1]{0}', space=sflag, size = 0x4, scoped, tag = 'scoped memory for tpu_custom_call.1']
    #allocation6 [shape = 'u8[8192]{0}', space=vmem, size = 0x2000, scoped, tag = 'input window, operand 3, single buffered']
    #allocation7 [shape = 's32[1]{0}', space=sflag, size = 0x4, scoped, tag = 'scoped memory for tpu_custom_call.1']
    #allocation8 [shape = 'u8[16384]{0}', space=vmem, size = 0x4000, scoped, tag = 'input window, operand 5, single buffered']
    #allocation9 [shape = 'u8[512]{0}', space=vmem, size = 0x400, scoped, tag = 'input window, operand 8, single buffered']
    #allocation10 [shape = 's32[1]{0}', space=sflag, size = 0x4, scoped, tag = 'scoped memory for tpu_custom_call.1']
    #allocation11 [shape = 'u8[65536]{0}', space=vmem, size = 0x10000, scoped, tag = 'output window, operand 0, single buffered']
    %18 = vsyncpa [#allocation4], 0
    %19 = vsyncpa [#allocation7], 0
    %20 = vsyncpa [#allocation10], 0
    %21 = vsyncpa [#allocation5], 0
    // Predicated region
    $region2: #{tpu_custom_call.1} parent=1 // pred_check
      _
    $region3: #{tpu_custom_call.1} parent=1 // pred_check_branch
      %23 = sbr.rel (0) target = $region5
    $region4: #{tpu_custom_call.1} parent=1 // pred_region
      _
    $region5: #{tpu_custom_call.1} parent=1 // pred_fallthru
      _
    // Predicated region
    $region6: #{tpu_custom_call.1} parent=1 // pred_check
      _
    $region7: #{tpu_custom_call.1} parent=1 // pred_check_branch
      %25 = sbr.rel (0) target = $region9
    $region8: #{tpu_custom_call.1} parent=1 // pred_region
      _
    $region9: #{tpu_custom_call.1} parent=1 // pred_fallthru
      _
    // Predicated region
    $region10: #{tpu_custom_call.1} parent=1 // pred_check
      _
    $region11: #{tpu_custom_call.1} parent=1 // pred_check_branch
      %27 = sbr.rel (0) target = $region13
    $region12: #{tpu_custom_call.1} parent=1 // pred_region
      %s29 = ssub.s32 128, 128
      %30 = vsyncadd [#allocation4], %s29
      %s31 = sshll.u32 [#allocation3], 4
      %s32 = int_to_ptr.vmem [resolvable:$true] %s31
      %37 = dma.hbm_to_vmem [thread:$0]  %s2, 128, %s32, [#allocation4], 64, 64, 4
    $region13: #{tpu_custom_call.1} parent=1 // pred_fallthru
      _
    // Predicated region
    $region14: #{tpu_custom_call.1} parent=1 // pred_check
      _
    $region15: #{tpu_custom_call.1} parent=1 // pred_check_branch
      %39 = sbr.rel (0) target = $region17
    $region16: #{tpu_custom_call.1} parent=1 // pred_region
      %s41 = ssub.s32 256, 256
      %42 = vsyncadd [#allocation7], %s41
      %s43 = sshll.u32 [#allocation6], 4
      %s44 = int_to_ptr.vmem [resolvable:$true] %s43
      %49 = dma.hbm_to_vmem [thread:$0]  %s3, 256, %s44, [#allocation7], 128, 128, 8
    $region17: #{tpu_custom_call.1} parent=1 // pred_fallthru
      _
    // Predicated region
    $region18: #{tpu_custom_call.1} parent=1 // pred_check
      _
    $region19: #{tpu_custom_call.1} parent=1 // pred_check_branch
      %51 = sbr.rel (0) target = $region21
    $region20: #{tpu_custom_call.1} parent=1 // pred_region
      _
    $region21: #{tpu_custom_call.1} parent=1 // pred_fallthru
      _
    // Predicated region
    $region22: #{tpu_custom_call.1} parent=1 // pred_check
      _
    $region23: #{tpu_custom_call.1} parent=1 // pred_check_branch
      %53 = sbr.rel (0) target = $region25
    $region24: #{tpu_custom_call.1} parent=1 // pred_region
      %s55 = ssub.s32 512, 512
      %56 = vsyncadd [#allocation7], %s55
      %s57 = sshll.u32 [#allocation8], 4
      %s58 = int_to_ptr.vmem [resolvable:$true] %s57
      %63 = dma.hbm_to_vmem [thread:$0]  %s5, 512, %s58, [#allocation7], 256, 256, 16
    $region25: #{tpu_custom_call.1} parent=1 // pred_fallthru
      _
    // Predicated region
    $region26: #{tpu_custom_call.1} parent=1 // pred_check
      _
    $region27: #{tpu_custom_call.1} parent=1 // pred_check_branch
      %65 = sbr.rel (0) target = $region29
    $region28: #{tpu_custom_call.1} parent=1 // pred_region
      _
    $region29: #{tpu_custom_call.1} parent=1 // pred_fallthru
      _
    // Predicated region
    $region30: #{tpu_custom_call.1} parent=1 // pred_check
      _
    $region31: #{tpu_custom_call.1} parent=1 // pred_check_branch
      %67 = sbr.rel (0) target = $region33
    $region32: #{tpu_custom_call.1} parent=1 // pred_region
      _
    $region33: #{tpu_custom_call.1} parent=1 // pred_fallthru
      _
    // Predicated region
    $region34: #{tpu_custom_call.1} parent=1 // pred_check
      _
    $region35: #{tpu_custom_call.1} parent=1 // pred_check_branch
      %69 = sbr.rel (0) target = $region37
    $region36: #{tpu_custom_call.1} parent=1 // pred_region
      %s71 = ssub.s32 16, 16
      %72 = vsyncadd [#allocation10], %s71
      %s74 = sshll.u32 [#allocation9], 4
      %s75 = int_to_ptr.vmem [resolvable:$true] %s74
      %77 = dma.hbm_to_vmem [thread:$0]  %s8, 16, %s75, [#allocation10]
    $region37: #{tpu_custom_call.1} parent=1 // pred_fallthru
      _
    // Predicated region
    $region38: #{tpu_custom_call.1} parent=1 // pred_check
      _
    $region39: #{tpu_custom_call.1} parent=1 // pred_check_branch
      %79 = sbr.rel (0) target = $region41
    $region40: #{tpu_custom_call.1} parent=1 // pred_region
      _
    $region41: #{tpu_custom_call.1} parent=1 // pred_fallthru
      _
    // Predicated region
    $region42: #{tpu_custom_call.1} parent=1 // pred_check
      _
    $region43: #{tpu_custom_call.1} parent=1 // pred_check_branch
      %81 = sbr.rel (0) target = $region45
    $region44: #{tpu_custom_call.1} parent=1 // pred_region
      _
    $region45: #{tpu_custom_call.1} parent=1 // pred_fallthru
      _
    // Predicated region
    $region46: #{tpu_custom_call.1} parent=1 // pred_check
      _
    $region47: #{tpu_custom_call.1} parent=1 // pred_check_branch
      %83 = sbr.rel (0) target = $region49
    $region48: #{tpu_custom_call.1} parent=1 // pred_region
      _
    $region49: #{tpu_custom_call.1} parent=1 // pred_fallthru
      _
    // Predicated region
    $region50: #{tpu_custom_call.1} parent=1 // pred_check
      _
    $region51: #{tpu_custom_call.1} parent=1 // pred_check_branch
      %85 = sbr.rel (0) target = $region53
    $region52: #{tpu_custom_call.1} parent=1 // pred_region
      _
    $region53: #{tpu_custom_call.1} parent=1 // pred_fallthru
      _
    // Predicated region
    $region54: #{tpu_custom_call.1} parent=1 // pred_check
      _
    $region55: #{tpu_custom_call.1} parent=1 // pred_check_branch
      %87 = sbr.rel (0) target = $region57
    $region56: #{tpu_custom_call.1} parent=1 // pred_region
      %88 = dma.done [#allocation4], 128
    $region57: #{tpu_custom_call.1} parent=1 // pred_fallthru
      _
    // Predicated region
    $region58: #{tpu_custom_call.1} parent=1 // pred_check
      _
    $region59: #{tpu_custom_call.1} parent=1 // pred_check_branch
      %90 = sbr.rel (0) target = $region61
    $region60: #{tpu_custom_call.1} parent=1 // pred_region
      %91 = dma.done [#allocation7], 256
    $region61: #{tpu_custom_call.1} parent=1 // pred_fallthru
      _
    // Predicated region
    $region62: #{tpu_custom_call.1} parent=1 // pred_check
      _
    $region63: #{tpu_custom_call.1} parent=1 // pred_check_branch
      %93 = sbr.rel (0) target = $region65
    $region64: #{tpu_custom_call.1} parent=1 // pred_region
      %94 = dma.done [#allocation7], 512
    $region65: #{tpu_custom_call.1} parent=1 // pred_fallthru
      _
    // Predicated region
    $region66: #{tpu_custom_call.1} parent=1 // pred_check
      _
    $region67: #{tpu_custom_call.1} parent=1 // pred_check_branch
      %96 = sbr.rel (0) target = $region69
    $region68: #{tpu_custom_call.1} parent=1 // pred_region
      %97 = dma.done [#allocation10], 16
    $region69: #{tpu_custom_call.1} parent=1 // pred_fallthru
      _
    %v98 = vld [vmem:[%s0] sm:$0xff]
    %v99 = vld [vmem:[%s0 + $0x8] sm:$0xff]
    %v100 = vld [vmem:[%s0 + $0x10] sm:$0xff]
    %v101 = vld [vmem:[%s0 + $0x18] sm:$0xff]
    %v102 = vld [vmem:[%s0 + $0x20] sm:$0xff]
    %v103 = vld [vmem:[%s0 + $0x28] sm:$0xff]
    %v104 = vld [vmem:[%s0 + $0x30] sm:$0xff]
    %v105 = vld [vmem:[%s0 + $0x38] sm:$0xff]
    %v106 = vld [vmem:[%s0 + $0x40] sm:$0xff]
    %v107 = vld [vmem:[%s0 + $0x48] sm:$0xff]
    %v108 = vld [vmem:[%s0 + $0x50] sm:$0xff]
    %v109 = vld [vmem:[%s0 + $0x58] sm:$0xff]
    %v110 = vld [vmem:[%s0 + $0x60] sm:$0xff]
    %v111 = vld [vmem:[%s0 + $0x68] sm:$0xff]
    %v112 = vld [vmem:[%s0 + $0x70] sm:$0xff]
    %v113 = vld [vmem:[%s0 + $0x78] sm:$0xff]
    %v114 = vld [vmem:[#allocation6] sm:$0xff]
    %v115 = vld [vmem:[#allocation6 + $0x8] sm:$0xff]
    %v116 = vld [vmem:[%s4] sm:$0xff]
    %v117 = vld [vmem:[%s4 + $0x8] sm:$0xff]
    %119 = vset.pattern.permute.xlu0 0
    %120 = vperm.xlu0 %119, %v116
    %v121 = vpop.permute.xlu0 %120
    %124 = vset.pattern.permute.xlu0 0
    %125 = vperm.xlu0 %124, %v117
    %v126 = vpop.permute.xlu0 %125
    %vm128 = vcmask 261120
    %v130 = vsel %vm128, %v114, 0
    %v133 = vsel %vm128, %v115, 0
    %135 = vmatprep.subr.mxu0 0.0
    %136 = vmatpush1.msra.mxu0 0.0
    %137 = vmatprep.subr.mxu0 0.0
    %138 = vmatpush1.msra.mxu0 0.0
    %139 = vmatprep.subr.mxu0 0.0
    %140 = vmatpush1.msra.mxu0 0.0
    %141 = vmatprep.subr.mxu0 0.0
    %142 = vmatpush1.msra.mxu0 0.0
    %143 = vmatprep.subr.mxu0 0.0
    %144 = vmatpush1.msra.mxu0 0.0
    %145 = vmatprep.subr.mxu0 0.0
    %146 = vmatpush1.msra.mxu0 0.0
    %147 = vmatprep.subr.mxu0 0.0
    %148 = vmatpush1.msra.mxu0 0.0
    %149 = vmatprep.subr.mxu0 0.0
    %150 = vmatpush1.msra.mxu0 0.0
    %151 = vmatprep.subr.mxu0 0.0
    %152 = vmatpush1.msra.mxu0 0.0
    %153 = vmatprep.subr.mxu0 0.0
    %154 = vmatpush1.msra.mxu0 0.0
    %155 = vmatprep.subr.mxu0 0.0
    %156 = vmatpush1.msra.mxu0 0.0
    %157 = vmatprep.subr.mxu0 0.0
    %158 = vmatpush1.msra.mxu0 0.0
    %159 = vmatprep.subr.mxu0 %v111
    %160 = vmatpush1.msra.mxu0 %v110
    %161 = vmatprep.subr.mxu0 %v107
    %162 = vmatpush1.msra.mxu0 %v106
    %163 = vmatprep.subr.mxu0 %v103
    %164 = vmatpush1.msra.mxu0 %v102
    %165 = vmatprep.subr.mxu0 %v99
    %166 = vmatpush1.msra.mxu0 %v98
    %167 = vmatprep.subr.mxu0 0.0
    %168 = vmatpush2.msra.mxu0 0.0
    %169 = vmatprep.subr.mxu0 0.0
    %170 = vmatpush2.msra.mxu0 0.0
    %171 = vmatprep.subr.mxu0 0.0
    %172 = vmatpush2.msra.mxu0 0.0
    %173 = vmatprep.subr.mxu0 0.0
    %174 = vmatpush2.msra.mxu0 0.0
    %175 = vmatprep.subr.mxu0 0.0
    %176 = vmatpush2.msra.mxu0 0.0
    %177 = vmatprep.subr.mxu0 0.0
    %178 = vmatpush2.msra.mxu0 0.0
    %179 = vmatprep.subr.mxu0 0.0
    %180 = vmatpush2.msra.mxu0 0.0
    %181 = vmatprep.subr.mxu0 0.0
    %182 = vmatpush2.msra.mxu0 0.0
    %183 = vmatprep.subr.mxu0 0.0
    %184 = vmatpush2.msra.mxu0 0.0
    %185 = vmatprep.subr.mxu0 0.0
    %186 = vmatpush2.msra.mxu0 0.0
    %187 = vmatprep.subr.mxu0 0.0
    %188 = vmatpush2.msra.mxu0 0.0
    %189 = vmatprep.subr.mxu0 0.0
    %190 = vmatpush2.msra.mxu0 0.0
    %191 = vmatprep.subr.mxu0 0.0
    %192 = vmatpush2.msra.mxu0 0.0
    %193 = vmatprep.subr.mxu0 0.0
    %194 = vmatpush2.msra.mxu0 0.0
    %195 = vmatprep.subr.mxu0 0.0
    %196 = vmatpush2.msra.mxu0 0.0
    %197 = vmatprep.subr.mxu0 0.0
    %198 = vmatpush2.msra.mxu0 0.0
    %199 = vmatprep.mubr.f32.mxu0 0.0
    %200 = vmatmul.mubr.f32.gmra.mxu0 %v130
    %v201 = vpop.f32.mrf.mxu0
    %v202 = vadd.f32 %v121, %v201
    %v203 = vpop.f32.mrf.mxu0
    %v204 = vadd.f32 %v121, %v203
    %205 = vmatprep.mubr.f32.mxu0 0.0
    %206 = vmatmul.mubr.f32.gmra.mxu0 %v133
    %v207 = vpop.f32.mrf.mxu0
    %v208 = vadd.f32 %v126, %v207
    %v209 = vpop.f32.mrf.mxu0
    %v210 = vadd.f32 %v126, %v209
    %211 = vdwg.mxu0
    %212 = vmatprep.subr.mxu0 0.0
    %213 = vmatpush1.msra.mxu0 0.0
    %214 = vmatprep.subr.mxu0 0.0
    %215 = vmatpush1.msra.mxu0 0.0
    %216 = vmatprep.subr.mxu0 0.0
    %217 = vmatpush1.msra.mxu0 0.0
    %218 = vmatprep.subr.mxu0 0.0
    %219 = vmatpush1.msra.mxu0 0.0
    %220 = vmatprep.subr.mxu0 0.0
    %221 = vmatpush1.msra.mxu0 0.0
    %222 = vmatprep.subr.mxu0 0.0
    %223 = vmatpush1.msra.mxu0 0.0
    %224 = vmatprep.subr.mxu0 0.0
    %225 = vmatpush1.msra.mxu0 0.0
    %226 = vmatprep.subr.mxu0 0.0
    %227 = vmatpush1.msra.mxu0 0.0
    %228 = vmatprep.subr.mxu0 0.0
    %229 = vmatpush1.msra.mxu0 0.0
    %230 = vmatprep.subr.mxu0 0.0
    %231 = vmatpush1.msra.mxu0 0.0
    %232 = vmatprep.subr.mxu0 0.0
    %233 = vmatpush1.msra.mxu0 0.0
    %234 = vmatprep.subr.mxu0 0.0
    %235 = vmatpush1.msra.mxu0 0.0
    %236 = vmatprep.subr.mxu0 %v113
    %237 = vmatpush1.msra.mxu0 %v112
    %238 = vmatprep.subr.mxu0 %v109
    %239 = vmatpush1.msra.mxu0 %v108
    %240 = vmatprep.subr.mxu0 %v105
    %241 = vmatpush1.msra.mxu0 %v104
    %242 = vmatprep.subr.mxu0 %v101
    %243 = vmatpush1.msra.mxu0 %v100
    %244 = vmatprep.subr.mxu0 0.0
    %245 = vmatpush2.msra.mxu0 0.0
    %246 = vmatprep.subr.mxu0 0.0
    %247 = vmatpush2.msra.mxu0 0.0
    %248 = vmatprep.subr.mxu0 0.0
    %249 = vmatpush2.msra.mxu0 0.0
    %250 = vmatprep.subr.mxu0 0.0
    %251 = vmatpush2.msra.mxu0 0.0
    %252 = vmatprep.subr.mxu0 0.0
    %253 = vmatpush2.msra.mxu0 0.0
    %254 = vmatprep.subr.mxu0 0.0
    %255 = vmatpush2.msra.mxu0 0.0
    %256 = vmatprep.subr.mxu0 0.0
    %257 = vmatpush2.msra.mxu0 0.0
    %258 = vmatprep.subr.mxu0 0.0
    %259 = vmatpush2.msra.mxu0 0.0
    %260 = vmatprep.subr.mxu0 0.0
    %261 = vmatpush2.msra.mxu0 0.0
    %262 = vmatprep.subr.mxu0 0.0
    %263 = vmatpush2.msra.mxu0 0.0
    %264 = vmatprep.subr.mxu0 0.0
    %265 = vmatpush2.msra.mxu0 0.0
    %266 = vmatprep.subr.mxu0 0.0
    %267 = vmatpush2.msra.mxu0 0.0
    %268 = vmatprep.subr.mxu0 0.0
    %269 = vmatpush2.msra.mxu0 0.0
    %270 = vmatprep.subr.mxu0 0.0
    %271 = vmatpush2.msra.mxu0 0.0
    %272 = vmatprep.subr.mxu0 0.0
    %273 = vmatpush2.msra.mxu0 0.0
    %274 = vmatprep.subr.mxu0 0.0
    %275 = vmatpush2.msra.mxu0 0.0
    %276 = vmatprep.mubr.f32.mxu0 0.0
    %277 = vmatmul.mubr.f32.gmra.mxu0 %v130
    %v278 = vpop.f32.mrf.mxu0
    %v279 = vadd.f32 %v121, %v278
    %v280 = vpop.f32.mrf.mxu0
    %v281 = vadd.f32 %v121, %v280
    %282 = vmatprep.mubr.f32.mxu0 0.0
    %283 = vmatmul.mubr.f32.gmra.mxu0 %v133
    %v284 = vpop.f32.mrf.mxu0
    %v285 = vadd.f32 %v126, %v284
    %v286 = vpop.f32.mrf.mxu0
    %v287 = vadd.f32 %v126, %v286
    %288 = vdwg.mxu0
    %v289 = vmax.f32 %v202, 0.0
    %v290 = vmax.f32 %v204, 0.0
    %v291 = vmax.f32 %v279, 0.0
    %v292 = vmax.f32 %v281, 0.0
    %v293 = vmax.f32 %v208, 0.0
    %v294 = vmax.f32 %v210, 0.0
    %v295 = vmax.f32 %v285, 0.0
    %v296 = vmax.f32 %v287, 0.0
    %297 = vrot.lane.b32.xlu0 %v289, 17
    %v298 = vpop.permute.xlu0 %297
    %299 = vrot.lane.b32.xlu0 %v293, 17
    %v300 = vpop.permute.xlu0 %299
    %301 = vrot.lane.b32.xlu0 %v290, 17
    %v302 = vpop.permute.xlu0 %301
    %303 = vrot.lane.b32.xlu0 %v294, 17
    %v304 = vpop.permute.xlu0 %303
    %305 = vrot.lane.b32.xlu0 %v291, 17
    %v306 = vpop.permute.xlu0 %305
    %307 = vrot.lane.b32.xlu0 %v295, 17
    %v308 = vpop.permute.xlu0 %307
    %309 = vrot.lane.b32.xlu0 %v292, 17
    %v310 = vpop.permute.xlu0 %309
    %311 = vrot.lane.b32.xlu0 %v296, 17
    %v312 = vpop.permute.xlu0 %311
    %v313 = vlaneseq
    %v314 = vand.u32 %v313, 127
    %vm315 = vcmp.lt.s32.totalorder %v314, 17
    %v316 = vsel %vm315, %v306, %v310
    %v317 = vsel %vm315, %v308, %v312
    %v318 = vsel %vm315, %v302, %v306
    %v319 = vsel %vm315, %v304, %v308
    %v320 = vsel %vm315, %v298, %v302
    %v321 = vsel %vm315, %v300, %v304
    %v322 = vsel %vm315, %v310, %v298
    %v323 = vsel %vm315, %v312, %v300
    %v324 = vld [vmem:[%s1] sm:$0xf]
    %v326 = vlaneseq
    %v327 = vshrl.u32 %v326, 7
    %v328 = vsub.s32 0, %v327
    %v329 = vrot.slane %v324, %v328
    %v330 = vlaneseq
    %v331 = vshrl.u32 %v330, 7
    %v332 = vsub.s32 1, %v331
    %v333 = vrot.slane %v324, %v332
    %v334 = vlaneseq
    %v335 = vshrl.u32 %v334, 7
    %v336 = vsub.s32 2, %v335
    %v337 = vrot.slane %v324, %v336
    %v338 = vlaneseq
    %v339 = vshrl.u32 %v338, 7
    %v340 = vsub.s32 3, %v339
    %v341 = vrot.slane %v324, %v340
    %v346 = vmul.f32 %v322, %v329
    %v347 = vmul.f32 %v320, %v333
    %v348 = vmul.f32 %v318, %v337
    %v349 = vmul.f32 %v316, %v341
    %v350 = vmul.f32 %v323, %v329
    %v351 = vmul.f32 %v321, %v333
    %v352 = vmul.f32 %v319, %v337
    %v353 = vmul.f32 %v317, %v341
    %354 = vst [vmem:[#allocation2] sm:$0xff] %v346
    %355 = vst [vmem:[#allocation2 + $0x8] sm:$0xff] %v347
    %356 = vst [vmem:[#allocation2 + $0x10] sm:$0xff] %v348
    %357 = vst [vmem:[#allocation2 + $0x18] sm:$0xff] %v349
    %358 = vst [vmem:[#allocation2 + $0x20] sm:$0xff] %v350
    %359 = vst [vmem:[#allocation2 + $0x28] sm:$0xff] %v351
    %360 = vst [vmem:[#allocation2 + $0x30] sm:$0xff] %v352
    %361 = vst [vmem:[#allocation2 + $0x38] sm:$0xff] %v353
    %362 = vrot.lane.b32.xlu0 %v289, 16
    %v363 = vpop.permute.xlu0 %362
    %364 = vrot.lane.b32.xlu0 %v293, 16
    %v365 = vpop.permute.xlu0 %364
    %366 = vrot.lane.b32.xlu0 %v290, 16
    %v367 = vpop.permute.xlu0 %366
    %368 = vrot.lane.b32.xlu0 %v294, 16
    %v369 = vpop.permute.xlu0 %368
    %370 = vrot.lane.b32.xlu0 %v291, 16
    %v371 = vpop.permute.xlu0 %370
    %372 = vrot.lane.b32.xlu0 %v295, 16
    %v373 = vpop.permute.xlu0 %372
    %374 = vrot.lane.b32.xlu0 %v292, 16
    %v375 = vpop.permute.xlu0 %374
    %376 = vrot.lane.b32.xlu0 %v296, 16
    %v377 = vpop.permute.xlu0 %376
    %vm378 = vcmp.lt.s32.totalorder %v314, 16
    %v379 = vsel %vm378, %v371, %v375
    %v380 = vsel %vm378, %v373, %v377
    %v381 = vsel %vm378, %v367, %v371
    %v382 = vsel %vm378, %v369, %v373
    %v383 = vsel %vm378, %v363, %v367
    %v384 = vsel %vm378, %v365, %v369
    %v385 = vsel %vm378, %v375, %v363
    %v386 = vsel %vm378, %v377, %v365
    %s387 = scalar_lea.vmem %s1, 4
    %v388 = vld [vmem:[%s387] sm:$0xf]
    %v390 = vlaneseq
    %v391 = vshrl.u32 %v390, 7
    %v392 = vsub.s32 0, %v391
    %v393 = vrot.slane %v388, %v392
    %v394 = vlaneseq
    %v395 = vshrl.u32 %v394, 7
    %v396 = vsub.s32 1, %v395
    %v397 = vrot.slane %v388, %v396
    %v398 = vlaneseq
    %v399 = vshrl.u32 %v398, 7
    %v400 = vsub.s32 2, %v399
    %v401 = vrot.slane %v388, %v400
    %v402 = vlaneseq
    %v403 = vshrl.u32 %v402, 7
    %v404 = vsub.s32 3, %v403
    %v405 = vrot.slane %v388, %v404
    %v410 = vmul.f32 %v385, %v393
    %v411 = vmul.f32 %v383, %v397
    %v412 = vmul.f32 %v381, %v401
    %v413 = vmul.f32 %v379, %v405
    %v414 = vmul.f32 %v386, %v393
    %v415 = vmul.f32 %v384, %v397
    %v416 = vmul.f32 %v382, %v401
    %v417 = vmul.f32 %v380, %v405
    %418 = vst [vmem:[#allocation2 + $0x40] sm:$0xff] %v410
    %419 = vst [vmem:[#allocation2 + $0x48] sm:$0xff] %v411
    %420 = vst [vmem:[#allocation2 + $0x50] sm:$0xff] %v412
    %421 = vst [vmem:[#allocation2 + $0x58] sm:$0xff] %v413
    %422 = vst [vmem:[#allocation2 + $0x60] sm:$0xff] %v414
    %423 = vst [vmem:[#allocation2 + $0x68] sm:$0xff] %v415
    %424 = vst [vmem:[#allocation2 + $0x70] sm:$0xff] %v416
    %425 = vst [vmem:[#allocation2 + $0x78] sm:$0xff] %v417
    %426 = vrot.lane.b32.xlu0 %v289, 15
    %v427 = vpop.permute.xlu0 %426
    %428 = vrot.lane.b32.xlu0 %v293, 15
    %v429 = vpop.permute.xlu0 %428
    %430 = vrot.lane.b32.xlu0 %v290, 15
    %v431 = vpop.permute.xlu0 %430
    %432 = vrot.lane.b32.xlu0 %v294, 15
    %v433 = vpop.permute.xlu0 %432
    %434 = vrot.lane.b32.xlu0 %v291, 15
    %v435 = vpop.permute.xlu0 %434
    %436 = vrot.lane.b32.xlu0 %v295, 15
    %v437 = vpop.permute.xlu0 %436
    %438 = vrot.lane.b32.xlu0 %v292, 15
    %v439 = vpop.permute.xlu0 %438
    %440 = vrot.lane.b32.xlu0 %v296, 15
    %v441 = vpop.permute.xlu0 %440
    %vm442 = vcmp.lt.s32.totalorder %v314, 15
    %v443 = vsel %vm442, %v435, %v439
    %v444 = vsel %vm442, %v437, %v441
    %v445 = vsel %vm442, %v431, %v435
    %v446 = vsel %vm442, %v433, %v437
    %v447 = vsel %vm442, %v427, %v431
    %v448 = vsel %vm442, %v429, %v433
    %v449 = vsel %vm442, %v439, %v427
    %v450 = vsel %vm442, %v441, %v429
    %s451 = scalar_lea.vmem %s1, 8
    %v452 = vld [vmem:[%s451] sm:$0xf]
    %v454 = vlaneseq
    %v455 = vshrl.u32 %v454, 7
    %v456 = vsub.s32 0, %v455
    %v457 = vrot.slane %v452, %v456
    %v458 = vlaneseq
    %v459 = vshrl.u32 %v458, 7
    %v460 = vsub.s32 1, %v459
    %v461 = vrot.slane %v452, %v460
    %v462 = vlaneseq
    %v463 = vshrl.u32 %v462, 7
    %v464 = vsub.s32 2, %v463
    %v465 = vrot.slane %v452, %v464
    %v466 = vlaneseq
    %v467 = vshrl.u32 %v466, 7
    %v468 = vsub.s32 3, %v467
    %v469 = vrot.slane %v452, %v468
    %v474 = vmul.f32 %v449, %v457
    %v475 = vmul.f32 %v447, %v461
    %v476 = vmul.f32 %v445, %v465
    %v477 = vmul.f32 %v443, %v469
    %v478 = vmul.f32 %v450, %v457
    %v479 = vmul.f32 %v448, %v461
    %v480 = vmul.f32 %v446, %v465
    %v481 = vmul.f32 %v444, %v469
    %482 = vst [vmem:[#allocation2 + $0x80] sm:$0xff] %v474
    %483 = vst [vmem:[#allocation2 + $0x88] sm:$0xff] %v475
    %484 = vst [vmem:[#allocation2 + $0x90] sm:$0xff] %v476
    %485 = vst [vmem:[#allocation2 + $0x98] sm:$0xff] %v477
    %486 = vst [vmem:[#allocation2 + $0xa0] sm:$0xff] %v478
    %487 = vst [vmem:[#allocation2 + $0xa8] sm:$0xff] %v479
    %488 = vst [vmem:[#allocation2 + $0xb0] sm:$0xff] %v480
    %489 = vst [vmem:[#allocation2 + $0xb8] sm:$0xff] %v481
    %490 = vrot.lane.b32.xlu0 %v289, 1
    %v491 = vpop.permute.xlu0 %490
    %492 = vrot.lane.b32.xlu0 %v293, 1
    %v493 = vpop.permute.xlu0 %492
    %494 = vrot.lane.b32.xlu0 %v290, 1
    %v495 = vpop.permute.xlu0 %494
    %496 = vrot.lane.b32.xlu0 %v294, 1
    %v497 = vpop.permute.xlu0 %496
    %498 = vrot.lane.b32.xlu0 %v291, 1
    %v499 = vpop.permute.xlu0 %498
    %500 = vrot.lane.b32.xlu0 %v295, 1
    %v501 = vpop.permute.xlu0 %500
    %502 = vrot.lane.b32.xlu0 %v292, 1
    %v503 = vpop.permute.xlu0 %502
    %504 = vrot.lane.b32.xlu0 %v296, 1
    %v505 = vpop.permute.xlu0 %504
    %vm506 = vcmp.lt.s32.totalorder %v314, 1
    %v507 = vsel %vm506, %v499, %v503
    %v508 = vsel %vm506, %v501, %v505
    %v509 = vsel %vm506, %v495, %v499
    %v510 = vsel %vm506, %v497, %v501
    %v511 = vsel %vm506, %v491, %v495
    %v512 = vsel %vm506, %v493, %v497
    %v513 = vsel %vm506, %v503, %v491
    %v514 = vsel %vm506, %v505, %v493
    %s515 = scalar_lea.vmem %s1, 12
    %v516 = vld [vmem:[%s515] sm:$0xf]
    %v518 = vlaneseq
    %v519 = vshrl.u32 %v518, 7
    %v520 = vsub.s32 0, %v519
    %v521 = vrot.slane %v516, %v520
    %v522 = vlaneseq
    %v523 = vshrl.u32 %v522, 7
    %v524 = vsub.s32 1, %v523
    %v525 = vrot.slane %v516, %v524
    %v526 = vlaneseq
    %v527 = vshrl.u32 %v526, 7
    %v528 = vsub.s32 2, %v527
    %v529 = vrot.slane %v516, %v528
    %v530 = vlaneseq
    %v531 = vshrl.u32 %v530, 7
    %v532 = vsub.s32 3, %v531
    %v533 = vrot.slane %v516, %v532
    %v538 = vmul.f32 %v513, %v521
    %v539 = vmul.f32 %v511, %v525
    %v540 = vmul.f32 %v509, %v529
    %v541 = vmul.f32 %v507, %v533
    %v542 = vmul.f32 %v514, %v521
    %v543 = vmul.f32 %v512, %v525
    %v544 = vmul.f32 %v510, %v529
    %v545 = vmul.f32 %v508, %v533
    %546 = vst [vmem:[#allocation2 + $0xc0] sm:$0xff] %v538
    %547 = vst [vmem:[#allocation2 + $0xc8] sm:$0xff] %v539
    %548 = vst [vmem:[#allocation2 + $0xd0] sm:$0xff] %v540
    %549 = vst [vmem:[#allocation2 + $0xd8] sm:$0xff] %v541
    %550 = vst [vmem:[#allocation2 + $0xe0] sm:$0xff] %v542
    %551 = vst [vmem:[#allocation2 + $0xe8] sm:$0xff] %v543
    %552 = vst [vmem:[#allocation2 + $0xf0] sm:$0xff] %v544
    %553 = vst [vmem:[#allocation2 + $0xf8] sm:$0xff] %v545
    %554 = vst [vmem:[#allocation2 + $0x100] sm:$0xff] %v289
    %555 = vst [vmem:[#allocation2 + $0x108] sm:$0xff] %v290
    %556 = vst [vmem:[#allocation2 + $0x110] sm:$0xff] %v291
    %557 = vst [vmem:[#allocation2 + $0x118] sm:$0xff] %v292
    %558 = vst [vmem:[#allocation2 + $0x120] sm:$0xff] %v293
    %559 = vst [vmem:[#allocation2 + $0x128] sm:$0xff] %v294
    %560 = vst [vmem:[#allocation2 + $0x130] sm:$0xff] %v295
    %561 = vst [vmem:[#allocation2 + $0x138] sm:$0xff] %v296
    %562 = vrot.lane.b32.xlu0 %v289, 127
    %v563 = vpop.permute.xlu0 %562
    %564 = vrot.lane.b32.xlu0 %v293, 127
    %v565 = vpop.permute.xlu0 %564
    %566 = vrot.lane.b32.xlu0 %v290, 127
    %v567 = vpop.permute.xlu0 %566
    %568 = vrot.lane.b32.xlu0 %v294, 127
    %v569 = vpop.permute.xlu0 %568
    %570 = vrot.lane.b32.xlu0 %v291, 127
    %v571 = vpop.permute.xlu0 %570
    %572 = vrot.lane.b32.xlu0 %v295, 127
    %v573 = vpop.permute.xlu0 %572
    %574 = vrot.lane.b32.xlu0 %v292, 127
    %v575 = vpop.permute.xlu0 %574
    %576 = vrot.lane.b32.xlu0 %v296, 127
    %v577 = vpop.permute.xlu0 %576
    %vm578 = vcmp.lt.s32.totalorder %v314, 127
    %v579 = vsel %vm578, %v571, %v575
    %v580 = vsel %vm578, %v573, %v577
    %v581 = vsel %vm578, %v567, %v571
    %v582 = vsel %vm578, %v569, %v573
    %v583 = vsel %vm578, %v563, %v567
    %v584 = vsel %vm578, %v565, %v569
    %v585 = vsel %vm578, %v575, %v563
    %v586 = vsel %vm578, %v577, %v565
    %s587 = scalar_lea.vmem %s1, 20
    %v588 = vld [vmem:[%s587] sm:$0xf]
    %v590 = vlaneseq
    %v591 = vshrl.u32 %v590, 7
    %v592 = vsub.s32 0, %v591
    %v593 = vrot.slane %v588, %v592
    %v594 = vlaneseq
    %v595 = vshrl.u32 %v594, 7
    %v596 = vsub.s32 1, %v595
    %v597 = vrot.slane %v588, %v596
    %v598 = vlaneseq
    %v599 = vshrl.u32 %v598, 7
    %v600 = vsub.s32 2, %v599
    %v601 = vrot.slane %v588, %v600
    %v602 = vlaneseq
    %v603 = vshrl.u32 %v602, 7
    %v604 = vsub.s32 3, %v603
    %v605 = vrot.slane %v588, %v604
    %v610 = vmul.f32 %v583, %v593
    %v611 = vmul.f32 %v581, %v597
    %v612 = vmul.f32 %v579, %v601
    %v613 = vmul.f32 %v585, %v605
    %v614 = vmul.f32 %v584, %v593
    %v615 = vmul.f32 %v582, %v597
    %v616 = vmul.f32 %v580, %v601
    %v617 = vmul.f32 %v586, %v605
    %618 = vst [vmem:[#allocation2 + $0x140] sm:$0xff] %v610
    %619 = vst [vmem:[#allocation2 + $0x148] sm:$0xff] %v611
    %620 = vst [vmem:[#allocation2 + $0x150] sm:$0xff] %v612
    %621 = vst [vmem:[#allocation2 + $0x158] sm:$0xff] %v613
    %622 = vst [vmem:[#allocation2 + $0x160] sm:$0xff] %v614
    %623 = vst [vmem:[#allocation2 + $0x168] sm:$0xff] %v615
    %624 = vst [vmem:[#allocation2 + $0x170] sm:$0xff] %v616
    %625 = vst [vmem:[#allocation2 + $0x178] sm:$0xff] %v617
    %626 = vrot.lane.b32.xlu0 %v289, 113
    %v627 = vpop.permute.xlu0 %626
    %628 = vrot.lane.b32.xlu0 %v293, 113
    %v629 = vpop.permute.xlu0 %628
    %630 = vrot.lane.b32.xlu0 %v290, 113
    %v631 = vpop.permute.xlu0 %630
    %632 = vrot.lane.b32.xlu0 %v294, 113
    %v633 = vpop.permute.xlu0 %632
    %634 = vrot.lane.b32.xlu0 %v291, 113
    %v635 = vpop.permute.xlu0 %634
    %636 = vrot.lane.b32.xlu0 %v295, 113
    %v637 = vpop.permute.xlu0 %636
    %638 = vrot.lane.b32.xlu0 %v292, 113
    %v639 = vpop.permute.xlu0 %638
    %640 = vrot.lane.b32.xlu0 %v296, 113
    %v641 = vpop.permute.xlu0 %640
    %vm642 = vcmp.lt.s32.totalorder %v314, 113
    %v643 = vsel %vm642, %v635, %v639
    %v644 = vsel %vm642, %v637, %v641
    %v645 = vsel %vm642, %v631, %v635
    %v646 = vsel %vm642, %v633, %v637
    %v647 = vsel %vm642, %v627, %v631
    %v648 = vsel %vm642, %v629, %v633
    %v649 = vsel %vm642, %v639, %v627
    %v650 = vsel %vm642, %v641, %v629
    %s651 = scalar_lea.vmem %s1, 24
    %v652 = vld [vmem:[%s651] sm:$0xf]
    %v654 = vlaneseq
    %v655 = vshrl.u32 %v654, 7
    %v656 = vsub.s32 0, %v655
    %v657 = vrot.slane %v652, %v656
    %v658 = vlaneseq
    %v659 = vshrl.u32 %v658, 7
    %v660 = vsub.s32 1, %v659
    %v661 = vrot.slane %v652, %v660
    %v662 = vlaneseq
    %v663 = vshrl.u32 %v662, 7
    %v664 = vsub.s32 2, %v663
    %v665 = vrot.slane %v652, %v664
    %v666 = vlaneseq
    %v667 = vshrl.u32 %v666, 7
    %v668 = vsub.s32 3, %v667
    %v669 = vrot.slane %v652, %v668
    %v674 = vmul.f32 %v647, %v657
    %v675 = vmul.f32 %v645, %v661
    %v676 = vmul.f32 %v643, %v665
    %v677 = vmul.f32 %v649, %v669
    %v678 = vmul.f32 %v648, %v657
    %v679 = vmul.f32 %v646, %v661
    %v680 = vmul.f32 %v644, %v665
    %v681 = vmul.f32 %v650, %v669
    %682 = vst [vmem:[#allocation2 + $0x180] sm:$0xff] %v674
    %683 = vst [vmem:[#allocation2 + $0x188] sm:$0xff] %v675
    %684 = vst [vmem:[#allocation2 + $0x190] sm:$0xff] %v676
    %685 = vst [vmem:[#allocation2 + $0x198] sm:$0xff] %v677
    %686 = vst [vmem:[#allocation2 + $0x1a0] sm:$0xff] %v678
    %687 = vst [vmem:[#allocation2 + $0x1a8] sm:$0xff] %v679
    %688 = vst [vmem:[#allocation2 + $0x1b0] sm:$0xff] %v680
    %689 = vst [vmem:[#allocation2 + $0x1b8] sm:$0xff] %v681
    %690 = vrot.lane.b32.xlu0 %v289, 112
    %v691 = vpop.permute.xlu0 %690
    %692 = vrot.lane.b32.xlu0 %v293, 112
    %v693 = vpop.permute.xlu0 %692
    %694 = vrot.lane.b32.xlu0 %v290, 112
    %v695 = vpop.permute.xlu0 %694
    %696 = vrot.lane.b32.xlu0 %v294, 112
    %v697 = vpop.permute.xlu0 %696
    %698 = vrot.lane.b32.xlu0 %v291, 112
    %v699 = vpop.permute.xlu0 %698
    %700 = vrot.lane.b32.xlu0 %v295, 112
    %v701 = vpop.permute.xlu0 %700
    %702 = vrot.lane.b32.xlu0 %v292, 112
    %v703 = vpop.permute.xlu0 %702
    %704 = vrot.lane.b32.xlu0 %v296, 112
    %v705 = vpop.permute.xlu0 %704
    %vm706 = vcmp.lt.s32.totalorder %v314, 112
    %v707 = vsel %vm706, %v699, %v703
    %v708 = vsel %vm706, %v701, %v705
    %v709 = vsel %vm706, %v695, %v699
    %v710 = vsel %vm706, %v697, %v701
    %v711 = vsel %vm706, %v691, %v695
    %v712 = vsel %vm706, %v693, %v697
    %v713 = vsel %vm706, %v703, %v691
    %v714 = vsel %vm706, %v705, %v693
    %s715 = scalar_lea.vmem %s1, 28
    %v716 = vld [vmem:[%s715] sm:$0xf]
    %v718 = vlaneseq
    %v719 = vshrl.u32 %v718, 7
    %v720 = vsub.s32 0, %v719
    %v721 = vrot.slane %v716, %v720
    %v722 = vlaneseq
    %v723 = vshrl.u32 %v722, 7
    %v724 = vsub.s32 1, %v723
    %v725 = vrot.slane %v716, %v724
    %v726 = vlaneseq
    %v727 = vshrl.u32 %v726, 7
    %v728 = vsub.s32 2, %v727
    %v729 = vrot.slane %v716, %v728
    %v730 = vlaneseq
    %v731 = vshrl.u32 %v730, 7
    %v732 = vsub.s32 3, %v731
    %v733 = vrot.slane %v716, %v732
    %v738 = vmul.f32 %v711, %v721
    %v739 = vmul.f32 %v709, %v725
    %v740 = vmul.f32 %v707, %v729
    %v741 = vmul.f32 %v713, %v733
    %v742 = vmul.f32 %v712, %v721
    %v743 = vmul.f32 %v710, %v725
    %v744 = vmul.f32 %v708, %v729
    %v745 = vmul.f32 %v714, %v733
    %746 = vst [vmem:[#allocation2 + $0x1c0] sm:$0xff] %v738
    %747 = vst [vmem:[#allocation2 + $0x1c8] sm:$0xff] %v739
    %748 = vst [vmem:[#allocation2 + $0x1d0] sm:$0xff] %v740
    %749 = vst [vmem:[#allocation2 + $0x1d8] sm:$0xff] %v741
    %750 = vst [vmem:[#allocation2 + $0x1e0] sm:$0xff] %v742
    %751 = vst [vmem:[#allocation2 + $0x1e8] sm:$0xff] %v743
    %752 = vst [vmem:[#allocation2 + $0x1f0] sm:$0xff] %v744
    %753 = vst [vmem:[#allocation2 + $0x1f8] sm:$0xff] %v745
    %754 = vrot.lane.b32.xlu0 %v289, 111
    %v755 = vpop.permute.xlu0 %754
    %756 = vrot.lane.b32.xlu0 %v293, 111
    %v757 = vpop.permute.xlu0 %756
    %758 = vrot.lane.b32.xlu0 %v290, 111
    %v759 = vpop.permute.xlu0 %758
    %760 = vrot.lane.b32.xlu0 %v294, 111
    %v761 = vpop.permute.xlu0 %760
    %762 = vrot.lane.b32.xlu0 %v291, 111
    %v763 = vpop.permute.xlu0 %762
    %764 = vrot.lane.b32.xlu0 %v295, 111
    %v765 = vpop.permute.xlu0 %764
    %766 = vrot.lane.b32.xlu0 %v292, 111
    %v767 = vpop.permute.xlu0 %766
    %768 = vrot.lane.b32.xlu0 %v296, 111
    %v769 = vpop.permute.xlu0 %768
    %vm770 = vcmp.lt.s32.totalorder %v314, 111
    %v771 = vsel %vm770, %v763, %v767
    %v772 = vsel %vm770, %v765, %v769
    %v773 = vsel %vm770, %v759, %v763
    %v774 = vsel %vm770, %v761, %v765
    %v775 = vsel %vm770, %v755, %v759
    %v776 = vsel %vm770, %v757, %v761
    %v777 = vsel %vm770, %v767, %v755
    %v778 = vsel %vm770, %v769, %v757
    %s779 = scalar_lea.vmem %s1, 32
    %v780 = vld [vmem:[%s779] sm:$0xf]
    %v782 = vlaneseq
    %v783 = vshrl.u32 %v782, 7
    %v784 = vsub.s32 0, %v783
    %v785 = vrot.slane %v780, %v784
    %v786 = vlaneseq
    %v787 = vshrl.u32 %v786, 7
    %v788 = vsub.s32 1, %v787
    %v789 = vrot.slane %v780, %v788
    %v790 = vlaneseq
    %v791 = vshrl.u32 %v790, 7
    %v792 = vsub.s32 2, %v791
    %v793 = vrot.slane %v780, %v792
    %v794 = vlaneseq
    %v795 = vshrl.u32 %v794, 7
    %v796 = vsub.s32 3, %v795
    %v797 = vrot.slane %v780, %v796
    %v802 = vmul.f32 %v775, %v785
    %v803 = vmul.f32 %v773, %v789
    %v804 = vmul.f32 %v771, %v793
    %v805 = vmul.f32 %v777, %v797
    %v806 = vmul.f32 %v776, %v785
    %v807 = vmul.f32 %v774, %v789
    %v808 = vmul.f32 %v772, %v793
    %v809 = vmul.f32 %v778, %v797
    %810 = vst [vmem:[#allocation2 + $0x200] sm:$0xff] %v802
    %811 = vst [vmem:[#allocation2 + $0x208] sm:$0xff] %v803
    %812 = vst [vmem:[#allocation2 + $0x210] sm:$0xff] %v804
    %813 = vst [vmem:[#allocation2 + $0x218] sm:$0xff] %v805
    %814 = vst [vmem:[#allocation2 + $0x220] sm:$0xff] %v806
    %815 = vst [vmem:[#allocation2 + $0x228] sm:$0xff] %v807
    %816 = vst [vmem:[#allocation2 + $0x230] sm:$0xff] %v808
    %817 = vst [vmem:[#allocation2 + $0x238] sm:$0xff] %v809
    %v818 = vld [vmem:[#allocation8] sm:$0xff]
    %v819 = vld [vmem:[#allocation8 + $0x8] sm:$0xff]
    %v820 = vld [vmem:[#allocation8 + $0x10] sm:$0xff]
    %v821 = vld [vmem:[#allocation8 + $0x18] sm:$0xff]
    %v822 = vld [vmem:[#allocation2] sm:$0xff]
    %v823 = vld [vmem:[#allocation2 + $0x8] sm:$0xff]
    %v824 = vld [vmem:[#allocation2 + $0x10] sm:$0xff]
    %v825 = vld [vmem:[#allocation2 + $0x18] sm:$0xff]
    %v826 = vld [vmem:[#allocation2 + $0x20] sm:$0xff]
    %v827 = vld [vmem:[#allocation2 + $0x28] sm:$0xff]
    %v828 = vld [vmem:[#allocation2 + $0x30] sm:$0xff]
    %v829 = vld [vmem:[#allocation2 + $0x38] sm:$0xff]
    %v830 = vld [vmem:[#allocation2 + $0x40] sm:$0xff]
    %v831 = vld [vmem:[#allocation2 + $0x48] sm:$0xff]
    %v832 = vld [vmem:[#allocation2 + $0x50] sm:$0xff]
    %v833 = vld [vmem:[#allocation2 + $0x58] sm:$0xff]
    %v834 = vld [vmem:[#allocation2 + $0x60] sm:$0xff]
    %v835 = vld [vmem:[#allocation2 + $0x68] sm:$0xff]
    %v836 = vld [vmem:[#allocation2 + $0x70] sm:$0xff]
    %v837 = vld [vmem:[#allocation2 + $0x78] sm:$0xff]
    %v838 = vld [vmem:[#allocation2 + $0x80] sm:$0xff]
    %v839 = vld [vmem:[#allocation2 + $0x88] sm:$0xff]
    %v840 = vld [vmem:[#allocation2 + $0x90] sm:$0xff]
    %v841 = vld [vmem:[#allocation2 + $0x98] sm:$0xff]
    %v842 = vld [vmem:[#allocation2 + $0xa0] sm:$0xff]
    %v843 = vld [vmem:[#allocation2 + $0xa8] sm:$0xff]
    %v844 = vld [vmem:[#allocation2 + $0xb0] sm:$0xff]
    %v845 = vld [vmem:[#allocation2 + $0xb8] sm:$0xff]
    %v846 = vld [vmem:[#allocation2 + $0xc0] sm:$0xff]
    %v847 = vld [vmem:[#allocation2 + $0xc8] sm:$0xff]
    %v848 = vld [vmem:[#allocation2 + $0xd0] sm:$0xff]
    %v849 = vld [vmem:[#allocation2 + $0xd8] sm:$0xff]
    %v850 = vld [vmem:[#allocation2 + $0xe0] sm:$0xff]
    %v851 = vld [vmem:[#allocation2 + $0xe8] sm:$0xff]
    %v852 = vld [vmem:[#allocation2 + $0xf0] sm:$0xff]
    %v853 = vld [vmem:[#allocation2 + $0xf8] sm:$0xff]
    %v854 = vld [vmem:[#allocation2 + $0x100] sm:$0xff]
    %v855 = vld [vmem:[#allocation2 + $0x108] sm:$0xff]
    %v856 = vld [vmem:[#allocation2 + $0x110] sm:$0xff]
    %v857 = vld [vmem:[#allocation2 + $0x118] sm:$0xff]
    %v858 = vld [vmem:[#allocation2 + $0x120] sm:$0xff]
    %v859 = vld [vmem:[#allocation2 + $0x128] sm:$0xff]
    %v860 = vld [vmem:[#allocation2 + $0x130] sm:$0xff]
    %v861 = vld [vmem:[#allocation2 + $0x138] sm:$0xff]
    %v862 = vld [vmem:[#allocation2 + $0x140] sm:$0xff]
    %v863 = vld [vmem:[#allocation2 + $0x148] sm:$0xff]
    %v864 = vld [vmem:[#allocation2 + $0x150] sm:$0xff]
    %v865 = vld [vmem:[#allocation2 + $0x158] sm:$0xff]
    %v866 = vld [vmem:[#allocation2 + $0x160] sm:$0xff]
    %v867 = vld [vmem:[#allocation2 + $0x168] sm:$0xff]
    %v868 = vld [vmem:[#allocation2 + $0x170] sm:$0xff]
    %v869 = vld [vmem:[#allocation2 + $0x178] sm:$0xff]
    %v870 = vld [vmem:[#allocation2 + $0x180] sm:$0xff]
    %v871 = vld [vmem:[#allocation2 + $0x188] sm:$0xff]
    %v872 = vld [vmem:[#allocation2 + $0x190] sm:$0xff]
    %v873 = vld [vmem:[#allocation2 + $0x198] sm:$0xff]
    %v874 = vld [vmem:[#allocation2 + $0x1a0] sm:$0xff]
    %v875 = vld [vmem:[#allocation2 + $0x1a8] sm:$0xff]
    %v876 = vld [vmem:[#allocation2 + $0x1b0] sm:$0xff]
    %v877 = vld [vmem:[#allocation2 + $0x1b8] sm:$0xff]
    %v878 = vld [vmem:[#allocation2 + $0x1c0] sm:$0xff]
    %v879 = vld [vmem:[#allocation2 + $0x1c8] sm:$0xff]
    %v880 = vld [vmem:[#allocation2 + $0x1d0] sm:$0xff]
    %v881 = vld [vmem:[#allocation2 + $0x1d8] sm:$0xff]
    %v882 = vld [vmem:[#allocation2 + $0x1e0] sm:$0xff]
    %v883 = vld [vmem:[#allocation2 + $0x1e8] sm:$0xff]
    %v884 = vld [vmem:[#allocation2 + $0x1f0] sm:$0xff]
    %v885 = vld [vmem:[#allocation2 + $0x1f8] sm:$0xff]
    %v886 = vld [vmem:[#allocation2 + $0x200] sm:$0xff]
    %v887 = vld [vmem:[#allocation2 + $0x208] sm:$0xff]
    %v888 = vld [vmem:[#allocation2 + $0x210] sm:$0xff]
    %v889 = vld [vmem:[#allocation2 + $0x218] sm:$0xff]
    %v890 = vld [vmem:[#allocation2 + $0x220] sm:$0xff]
    %v891 = vld [vmem:[#allocation2 + $0x228] sm:$0xff]
    %v892 = vld [vmem:[#allocation2 + $0x230] sm:$0xff]
    %v893 = vld [vmem:[#allocation2 + $0x238] sm:$0xff]
    %v894 = vld [vmem:[%s6] sm:$0xff]
    %v895 = vld [vmem:[%s6 + $0x8] sm:$0xff]
    %897 = vset.pattern.permute.xlu0 0
    %898 = vperm.xlu0 %897, %v894
    %v899 = vpop.permute.xlu0 %898
    %902 = vset.pattern.permute.xlu0 0
    %903 = vperm.xlu0 %902, %v895
    %v904 = vpop.permute.xlu0 %903
    %vm906 = vcmask 130048
    %v908 = vsel %vm906, %v819, 0
    %v911 = vsel %vm906, %v821, 0
    %913 = vmatprep.subr.mxu0 %v883
    %914 = vmatpush1.msra.mxu0 %v882
    %915 = vmatprep.subr.mxu0 %v879
    %916 = vmatpush1.msra.mxu0 %v878
    %917 = vmatprep.subr.mxu0 %v875
    %918 = vmatpush1.msra.mxu0 %v874
    %919 = vmatprep.subr.mxu0 %v871
    %920 = vmatpush1.msra.mxu0 %v870
    %921 = vmatprep.subr.mxu0 %v867
    %922 = vmatpush1.msra.mxu0 %v866
    %923 = vmatprep.subr.mxu0 %v863
    %924 = vmatpush1.msra.mxu0 %v862
    %925 = vmatprep.subr.mxu0 %v859
    %926 = vmatpush1.msra.mxu0 %v858
    %927 = vmatprep.subr.mxu0 %v855
    %928 = vmatpush1.msra.mxu0 %v854
    %929 = vmatprep.subr.mxu0 %v851
    %930 = vmatpush1.msra.mxu0 %v850
    %931 = vmatprep.subr.mxu0 %v847
    %932 = vmatpush1.msra.mxu0 %v846
    %933 = vmatprep.subr.mxu0 %v843
    %934 = vmatpush1.msra.mxu0 %v842
    %935 = vmatprep.subr.mxu0 %v839
    %936 = vmatpush1.msra.mxu0 %v838
    %937 = vmatprep.subr.mxu0 %v835
    %938 = vmatpush1.msra.mxu0 %v834
    %939 = vmatprep.subr.mxu0 %v831
    %940 = vmatpush1.msra.mxu0 %v830
    %941 = vmatprep.subr.mxu0 %v827
    %942 = vmatpush1.msra.mxu0 %v826
    %943 = vmatprep.subr.mxu0 %v823
    %944 = vmatpush1.msra.mxu0 %v822
    %945 = vmatprep.subr.mxu0 0.0
    %946 = vmatpush2.msra.mxu0 0.0
    %947 = vmatprep.subr.mxu0 0.0
    %948 = vmatpush2.msra.mxu0 0.0
    %949 = vmatprep.subr.mxu0 0.0
    %950 = vmatpush2.msra.mxu0 0.0
    %951 = vmatprep.subr.mxu0 0.0
    %952 = vmatpush2.msra.mxu0 0.0
    %953 = vmatprep.subr.mxu0 0.0
    %954 = vmatpush2.msra.mxu0 0.0
    %955 = vmatprep.subr.mxu0 0.0
    %956 = vmatpush2.msra.mxu0 0.0
    %957 = vmatprep.subr.mxu0 0.0
    %958 = vmatpush2.msra.mxu0 0.0
    %959 = vmatprep.subr.mxu0 0.0
    %960 = vmatpush2.msra.mxu0 0.0
    %961 = vmatprep.subr.mxu0 0.0
    %962 = vmatpush2.msra.mxu0 0.0
    %963 = vmatprep.subr.mxu0 0.0
    %964 = vmatpush2.msra.mxu0 0.0
    %965 = vmatprep.subr.mxu0 0.0
    %966 = vmatpush2.msra.mxu0 0.0
    %967 = vmatprep.subr.mxu0 0.0
    %968 = vmatpush2.msra.mxu0 0.0
    %969 = vmatprep.subr.mxu0 0.0
    %970 = vmatpush2.msra.mxu0 0.0
    %971 = vmatprep.subr.mxu0 0.0
    %972 = vmatpush2.msra.mxu0 0.0
    %973 = vmatprep.subr.mxu0 %v891
    %974 = vmatpush2.msra.mxu0 %v890
    %975 = vmatprep.subr.mxu0 %v887
    %976 = vmatpush2.msra.mxu0 %v886
    %977 = vmatprep.mubr.f32.mxu0 %v908
    %978 = vmatmul.mubr.f32.gmra.mxu0 %v818
    %v979 = vpop.f32.mrf.mxu0
    %v980 = vadd.f32 %v899, %v979
    %v981 = vpop.f32.mrf.mxu0
    %v982 = vadd.f32 %v899, %v981
    %983 = vmatprep.mubr.f32.mxu0 %v911
    %984 = vmatmul.mubr.f32.gmra.mxu0 %v820
    %v985 = vpop.f32.mrf.mxu0
    %v986 = vadd.f32 %v904, %v985
    %v987 = vpop.f32.mrf.mxu0
    %v988 = vadd.f32 %v904, %v987
    %989 = vdwg.mxu0
    %990 = vmatprep.subr.mxu0 %v885
    %991 = vmatpush1.msra.mxu0 %v884
    %992 = vmatprep.subr.mxu0 %v881
    %993 = vmatpush1.msra.mxu0 %v880
    %994 = vmatprep.subr.mxu0 %v877
    %995 = vmatpush1.msra.mxu0 %v876
    %996 = vmatprep.subr.mxu0 %v873
    %997 = vmatpush1.msra.mxu0 %v872
    %998 = vmatprep.subr.mxu0 %v869
    %999 = vmatpush1.msra.mxu0 %v868
    %1000 = vmatprep.subr.mxu0 %v865
    %1001 = vmatpush1.msra.mxu0 %v864
    %1002 = vmatprep.subr.mxu0 %v861
    %1003 = vmatpush1.msra.mxu0 %v860
    %1004 = vmatprep.subr.mxu0 %v857
    %1005 = vmatpush1.msra.mxu0 %v856
    %1006 = vmatprep.subr.mxu0 %v853
    %1007 = vmatpush1.msra.mxu0 %v852
    %1008 = vmatprep.subr.mxu0 %v849
    %1009 = vmatpush1.msra.mxu0 %v848
    %1010 = vmatprep.subr.mxu0 %v845
    %1011 = vmatpush1.msra.mxu0 %v844
    %1012 = vmatprep.subr.mxu0 %v841
    %1013 = vmatpush1.msra.mxu0 %v840
    %1014 = vmatprep.subr.mxu0 %v837
    %1015 = vmatpush1.msra.mxu0 %v836
    %1016 = vmatprep.subr.mxu0 %v833
    %1017 = vmatpush1.msra.mxu0 %v832
    %1018 = vmatprep.subr.mxu0 %v829
    %1019 = vmatpush1.msra.mxu0 %v828
    %1020 = vmatprep.subr.mxu0 %v825
    %1021 = vmatpush1.msra.mxu0 %v824
    %1022 = vmatprep.subr.mxu0 0.0
    %1023 = vmatpush2.msra.mxu0 0.0
    %1024 = vmatprep.subr.mxu0 0.0
    %1025 = vmatpush2.msra.mxu0 0.0
    %1026 = vmatprep.subr.mxu0 0.0
    %1027 = vmatpush2.msra.mxu0 0.0
    %1028 = vmatprep.subr.mxu0 0.0
    %1029 = vmatpush2.msra.mxu0 0.0
    %1030 = vmatprep.subr.mxu0 0.0
    %1031 = vmatpush2.msra.mxu0 0.0
    %1032 = vmatprep.subr.mxu0 0.0
    %1033 = vmatpush2.msra.mxu0 0.0
    %1034 = vmatprep.subr.mxu0 0.0
    %1035 = vmatpush2.msra.mxu0 0.0
    %1036 = vmatprep.subr.mxu0 0.0
    %1037 = vmatpush2.msra.mxu0 0.0
    %1038 = vmatprep.subr.mxu0 0.0
    %1039 = vmatpush2.msra.mxu0 0.0
    %1040 = vmatprep.subr.mxu0 0.0
    %1041 = vmatpush2.msra.mxu0 0.0
    %1042 = vmatprep.subr.mxu0 0.0
    %1043 = vmatpush2.msra.mxu0 0.0
    %1044 = vmatprep.subr.mxu0 0.0
    %1045 = vmatpush2.msra.mxu0 0.0
    %1046 = vmatprep.subr.mxu0 0.0
    %1047 = vmatpush2.msra.mxu0 0.0
    %1048 = vmatprep.subr.mxu0 0.0
    %1049 = vmatpush2.msra.mxu0 0.0
    %1050 = vmatprep.subr.mxu0 %v893
    %1051 = vmatpush2.msra.mxu0 %v892
    %1052 = vmatprep.subr.mxu0 %v889
    %1053 = vmatpush2.msra.mxu0 %v888
    %1054 = vmatprep.mubr.f32.mxu0 %v908
    %1055 = vmatmul.mubr.f32.gmra.mxu0 %v818
    %v1056 = vpop.f32.mrf.mxu0
    %v1057 = vadd.f32 %v899, %v1056
    %v1058 = vpop.f32.mrf.mxu0
    %v1059 = vadd.f32 %v899, %v1058
    %1060 = vmatprep.mubr.f32.mxu0 %v911
    %1061 = vmatmul.mubr.f32.gmra.mxu0 %v820
    %v1062 = vpop.f32.mrf.mxu0
    %v1063 = vadd.f32 %v904, %v1062
    %v1064 = vpop.f32.mrf.mxu0
    %v1065 = vadd.f32 %v904, %v1064
    %1066 = vdwg.mxu0
    %v1067 = vmax.f32 %v980, 0.0
    %v1068 = vmax.f32 %v982, 0.0
    %v1069 = vmax.f32 %v1057, 0.0
    %v1070 = vmax.f32 %v1059, 0.0
    %v1071 = vmax.f32 %v986, 0.0
    %v1072 = vmax.f32 %v988, 0.0
    %v1073 = vmax.f32 %v1063, 0.0
    %v1074 = vmax.f32 %v1065, 0.0
    %v1075 = vadd.f32 %v1067, %v1068
    %1076 = vadd.xlane.f32.xlu0 %v1075
    %v1077 = vpop.xlane.xlu0 %1076
    %v1078 = vadd.f32 %v1071, %v1072
    %1079 = vadd.xlane.f32.xlu0 %v1078
    %v1080 = vpop.xlane.xlu0 %1079
    %v1081 = vmul.f32 %v1077, 0.00390625
    %v1082 = vmul.f32 %v1080, 0.00390625
    %v1083 = vld [vmem:[%s7] sm:$0xff]
    %v1084 = vld [vmem:[%s7 + $0x8] sm:$0xff]
    %v1085 = vmul.f32 %v1083, %v1081
    %v1086 = vmul.f32 %v1084, %v1082
    %vm1087 = vcmask 31744
    %v1088 = vsel %vm1087, %v1085, 0.0
    %v1089 = vsel %vm1087, %v1086, 0.0
    %v1090 = vadd.f32 %v1088, %v1089
    %v1091 = vrot.slane %v1090, 4
    %v1092 = vadd.f32 %v1090, %v1091
    %v1093 = vrot.slane %v1092, 2
    %v1094 = vadd.f32 %v1092, %v1093
    %v1095 = vrot.slane %v1094, 1
    %v1096 = vadd.f32 %v1094, %v1095
    %v1097 = vld [vmem:[#allocation9] sm:$0x1]
    %v1098 = vadd.f32 %v1096, %v1097
    %v1099 = vmax.f32 %v1098, 0.0
    %v1100 = vld [vmem:[%s9] sm:$0xff]
    %v1101 = vld [vmem:[%s9 + $0x8] sm:$0xff]
    %v1102 = vlaneseq
    %v1103 = vshrl.u32 %v1102, 7
    %v1104 = vsub.s32 0, %v1103
    %v1105 = vrot.slane %v1099, %v1104
    %v1106 = vmul.f32 %v1100, %v1105
    %v1107 = vmul.f32 %v1101, %v1105
    %v1108 = vsel %vm1087, %v1106, 0.0
    %1109 = vadd.xlane.f32.xlu0 %v1108
    %v1110 = vpop.xlane.xlu0 %1109
    %v1111 = vsel %vm1087, %v1107, 0.0
    %1112 = vadd.xlane.f32.xlu0 %v1111
    %v1113 = vpop.xlane.xlu0 %1112
    %v1114 = vld [vmem:[%s10] sm:$0xff]
    %v1115 = vld [vmem:[%s10 + $0x8] sm:$0xff]
    %v1116 = vadd.f32 %v1110, %v1114
    %v1117 = vadd.f32 %v1113, %v1115
    %v1118 = vxor.u32 %v1116, 2147483648
    %v1119 = vxor.u32 %v1117, 2147483648
    %v1120 = vmul.f32 %v1118, 1.442695
    %v1121 = vpow.pop %v1120
    %v1122 = vmul.f32 %v1119, 1.442695
    %v1123 = vpow.pop %v1122
    %v1124 = vadd.f32 %v1121, 1.0
    %v1125 = vadd.f32 %v1123, 1.0
    %v1126 = vrcp.pop %v1124
    %v1127 = vmul.f32 1.0, %v1126
    %v1128 = vrcp.pop %v1125
    %v1129 = vmul.f32 1.0, %v1128
    %v1130 = vld [vmem:[#allocation3] sm:$0xf]
    %1132 = vset.pattern.permute.xlu0 0
    %1133 = vperm.xlu0 %1132, %v1127
    %v1134 = vpop.permute.xlu0 %1133
    %1137 = vset.pattern.permute.xlu0 0
    %1138 = vperm.xlu0 %1137, %v1129
    %v1139 = vpop.permute.xlu0 %1138
    %v1142 = vlaneseq
    %v1143 = vshrl.u32 %v1142, 7
    %v1144 = vsub.s32 0, %v1143
    %v1145 = vrot.slane %v1130, %v1144
    %v1146 = vlaneseq
    %v1147 = vshrl.u32 %v1146, 7
    %v1148 = vsub.s32 1, %v1147
    %v1149 = vrot.slane %v1130, %v1148
    %v1150 = vlaneseq
    %v1151 = vshrl.u32 %v1150, 7
    %v1152 = vsub.s32 2, %v1151
    %v1153 = vrot.slane %v1130, %v1152
    %v1154 = vlaneseq
    %v1155 = vshrl.u32 %v1154, 7
    %v1156 = vsub.s32 3, %v1155
    %v1157 = vrot.slane %v1130, %v1156
    %v1162 = vmul.f32 %v1134, %v1145
    %v1163 = vmul.f32 %v1134, %v1149
    %v1164 = vmul.f32 %v1134, %v1153
    %v1165 = vmul.f32 %v1134, %v1157
    %v1166 = vmul.f32 %v1139, %v1145
    %v1167 = vmul.f32 %v1139, %v1149
    %v1168 = vmul.f32 %v1139, %v1153
    %v1169 = vmul.f32 %v1139, %v1157
    %v1170 = vadd.f32 %v1162, 0.0
    %v1171 = vadd.f32 %v1163, 0.0
    %v1172 = vadd.f32 %v1164, 0.0
    %v1173 = vadd.f32 %v1165, 0.0
    %v1174 = vadd.f32 %v1166, 0.0
    %v1175 = vadd.f32 %v1167, 0.0
    %v1176 = vadd.f32 %v1168, 0.0
    %v1177 = vadd.f32 %v1169, 0.0
    %v1178 = vadd.f32 %v1069, %v1070
    %1179 = vadd.xlane.f32.xlu0 %v1178
    %v1180 = vpop.xlane.xlu0 %1179
    %v1181 = vadd.f32 %v1073, %v1074
    %1182 = vadd.xlane.f32.xlu0 %v1181
    %v1183 = vpop.xlane.xlu0 %1182
    %v1184 = vmul.f32 %v1180, 0.00390625
    %v1185 = vmul.f32 %v1183, 0.00390625
    %v1186 = vmul.f32 %v1083, %v1184
    %v1187 = vmul.f32 %v1084, %v1185
    %v1188 = vsel %vm1087, %v1186, 0.0
    %v1189 = vsel %vm1087, %v1187, 0.0
    %v1190 = vadd.f32 %v1188, %v1189
    %v1191 = vrot.slane %v1190, 4
    %v1192 = vadd.f32 %v1190, %v1191
    %v1193 = vrot.slane %v1192, 2
    %v1194 = vadd.f32 %v1192, %v1193
    %v1195 = vrot.slane %v1194, 1
    %v1196 = vadd.f32 %v1194, %v1195
    %v1197 = vadd.f32 %v1196, %v1097
    %v1198 = vmax.f32 %v1197, 0.0
    %v1199 = vlaneseq
    %v1200 = vshrl.u32 %v1199, 7
    %v1201 = vsub.s32 0, %v1200
    %v1202 = vrot.slane %v1198, %v1201
    %v1203 = vmul.f32 %v1100, %v1202
    %v1204 = vmul.f32 %v1101, %v1202
    %v1205 = vsel %vm1087, %v1203, 0.0
    %1206 = vadd.xlane.f32.xlu0 %v1205
    %v1207 = vpop.xlane.xlu0 %1206
    %v1208 = vsel %vm1087, %v1204, 0.0
    %1209 = vadd.xlane.f32.xlu0 %v1208
    %v1210 = vpop.xlane.xlu0 %1209
    %v1211 = vadd.f32 %v1207, %v1114
    %v1212 = vadd.f32 %v1210, %v1115
    %v1213 = vxor.u32 %v1211, 2147483648
    %v1214 = vxor.u32 %v1212, 2147483648
    %v1215 = vmul.f32 %v1213, 1.442695
    %v1216 = vpow.pop %v1215
    %v1217 = vmul.f32 %v1214, 1.442695
    %v1218 = vpow.pop %v1217
    %v1219 = vadd.f32 %v1216, 1.0
    %v1220 = vadd.f32 %v1218, 1.0
    %v1221 = vrcp.pop %v1219
    %v1222 = vmul.f32 1.0, %v1221
    %v1223 = vrcp.pop %v1220
    %v1224 = vmul.f32 1.0, %v1223
    %s1225 = scalar_lea.vmem [#allocation3], 4
    %v1226 = vld [vmem:[%s1225] sm:$0xf]
    %1228 = vset.pattern.permute.xlu0 0
    %1229 = vperm.xlu0 %1228, %v1222
    %v1230 = vpop.permute.xlu0 %1229
    %1233 = vset.pattern.permute.xlu0 0
    %1234 = vperm.xlu0 %1233, %v1224
    %v1235 = vpop.permute.xlu0 %1234
    %v1238 = vlaneseq
    %v1239 = vshrl.u32 %v1238, 7
    %v1240 = vsub.s32 0, %v1239
    %v1241 = vrot.slane %v1226, %v1240
    %v1242 = vlaneseq
    %v1243 = vshrl.u32 %v1242, 7
    %v1244 = vsub.s32 1, %v1243
    %v1245 = vrot.slane %v1226, %v1244
    %v1246 = vlaneseq
    %v1247 = vshrl.u32 %v1246, 7
    %v1248 = vsub.s32 2, %v1247
    %v1249 = vrot.slane %v1226, %v1248
    %v1250 = vlaneseq
    %v1251 = vshrl.u32 %v1250, 7
    %v1252 = vsub.s32 3, %v1251
    %v1253 = vrot.slane %v1226, %v1252
    %v1258 = vmul.f32 %v1230, %v1241
    %v1259 = vmul.f32 %v1230, %v1245
    %v1260 = vmul.f32 %v1230, %v1249
    %v1261 = vmul.f32 %v1230, %v1253
    %v1262 = vmul.f32 %v1235, %v1241
    %v1263 = vmul.f32 %v1235, %v1245
    %v1264 = vmul.f32 %v1235, %v1249
    %v1265 = vmul.f32 %v1235, %v1253
    %v1266 = vadd.f32 %v1170, %v1258
    %v1267 = vadd.f32 %v1171, %v1259
    %v1268 = vadd.f32 %v1172, %v1260
    %v1269 = vadd.f32 %v1173, %v1261
    %v1270 = vadd.f32 %v1174, %v1262
    %v1271 = vadd.f32 %v1175, %v1263
    %v1272 = vadd.f32 %v1176, %v1264
    %v1273 = vadd.f32 %v1177, %v1265
    %v1274 = vmul.f32 %v1067, %v1266
    %v1275 = vmul.f32 %v1068, %v1267
    %v1276 = vmul.f32 %v1069, %v1268
    %v1277 = vmul.f32 %v1070, %v1269
    %v1278 = vmul.f32 %v1071, %v1270
    %v1279 = vmul.f32 %v1072, %v1271
    %v1280 = vmul.f32 %v1073, %v1272
    %v1281 = vmul.f32 %v1074, %v1273
    %v1282 = vld [vmem:[%s11] sm:$0xff]
    %v1283 = vld [vmem:[%s11 + $0x8] sm:$0xff]
    %v1284 = vld [vmem:[%s11 + $0x10] sm:$0xff]
    %v1285 = vld [vmem:[%s11 + $0x18] sm:$0xff]
    %v1286 = vld [vmem:[%s12] sm:$0xff]
    %v1287 = vld [vmem:[%s12 + $0x8] sm:$0xff]
    %v1288 = vld [vmem:[%s12 + $0x10] sm:$0xff]
    %v1289 = vld [vmem:[%s12 + $0x18] sm:$0xff]
    %1291 = vset.pattern.permute.xlu0 0
    %1292 = vperm.xlu0 %1291, %v1286
    %v1293 = vpop.permute.xlu0 %1292
    %1296 = vset.pattern.permute.xlu0 0
    %1297 = vperm.xlu0 %1296, %v1287
    %v1298 = vpop.permute.xlu0 %1297
    %1301 = vset.pattern.permute.xlu0 0
    %1302 = vperm.xlu0 %1301, %v1288
    %v1303 = vpop.permute.xlu0 %1302
    %1306 = vset.pattern.permute.xlu0 0
    %1307 = vperm.xlu0 %1306, %v1289
    %v1308 = vpop.permute.xlu0 %1307
    %v1311 = vsel %vm906, %v1282, 0
    %v1314 = vsel %vm906, %v1283, 0
    %v1317 = vsel %vm906, %v1284, 0
    %v1320 = vsel %vm906, %v1285, 0
    %1322 = vmatprep.subr.mxu0 0.0
    %1323 = vmatpush1.msra.mxu0 0.0
    %1324 = vmatprep.subr.mxu0 0.0
    %1325 = vmatpush1.msra.mxu0 0.0
    %1326 = vmatprep.subr.mxu0 0.0
    %1327 = vmatpush1.msra.mxu0 0.0
    %1328 = vmatprep.subr.mxu0 0.0
    %1329 = vmatpush1.msra.mxu0 0.0
    %1330 = vmatprep.subr.mxu0 0.0
    %1331 = vmatpush1.msra.mxu0 0.0
    %1332 = vmatprep.subr.mxu0 0.0
    %1333 = vmatpush1.msra.mxu0 0.0
    %1334 = vmatprep.subr.mxu0 0.0
    %1335 = vmatpush1.msra.mxu0 0.0
    %1336 = vmatprep.subr.mxu0 0.0
    %1337 = vmatpush1.msra.mxu0 0.0
    %1338 = vmatprep.subr.mxu0 0.0
    %1339 = vmatpush1.msra.mxu0 0.0
    %1340 = vmatprep.subr.mxu0 0.0
    %1341 = vmatpush1.msra.mxu0 0.0
    %1342 = vmatprep.subr.mxu0 0.0
    %1343 = vmatpush1.msra.mxu0 0.0
    %1344 = vmatprep.subr.mxu0 0.0
    %1345 = vmatpush1.msra.mxu0 0.0
    %1346 = vmatprep.subr.mxu0 0.0
    %1347 = vmatpush1.msra.mxu0 0.0
    %1348 = vmatprep.subr.mxu0 0.0
    %1349 = vmatpush1.msra.mxu0 0.0
    %1350 = vmatprep.subr.mxu0 %v1279
    %1351 = vmatpush1.msra.mxu0 %v1278
    %1352 = vmatprep.subr.mxu0 %v1275
    %1353 = vmatpush1.msra.mxu0 %v1274
    %1354 = vmatprep.subr.mxu0 0.0
    %1355 = vmatpush2.msra.mxu0 0.0
    %1356 = vmatprep.subr.mxu0 0.0
    %1357 = vmatpush2.msra.mxu0 0.0
    %1358 = vmatprep.subr.mxu0 0.0
    %1359 = vmatpush2.msra.mxu0 0.0
    %1360 = vmatprep.subr.mxu0 0.0
    %1361 = vmatpush2.msra.mxu0 0.0
    %1362 = vmatprep.subr.mxu0 0.0
    %1363 = vmatpush2.msra.mxu0 0.0
    %1364 = vmatprep.subr.mxu0 0.0
    %1365 = vmatpush2.msra.mxu0 0.0
    %1366 = vmatprep.subr.mxu0 0.0
    %1367 = vmatpush2.msra.mxu0 0.0
    %1368 = vmatprep.subr.mxu0 0.0
    %1369 = vmatpush2.msra.mxu0 0.0
    %1370 = vmatprep.subr.mxu0 0.0
    %1371 = vmatpush2.msra.mxu0 0.0
    %1372 = vmatprep.subr.mxu0 0.0
    %1373 = vmatpush2.msra.mxu0 0.0
    %1374 = vmatprep.subr.mxu0 0.0
    %1375 = vmatpush2.msra.mxu0 0.0
    %1376 = vmatprep.subr.mxu0 0.0
    %1377 = vmatpush2.msra.mxu0 0.0
    %1378 = vmatprep.subr.mxu0 0.0
    %1379 = vmatpush2.msra.mxu0 0.0
    %1380 = vmatprep.subr.mxu0 0.0
    %1381 = vmatpush2.msra.mxu0 0.0
    %1382 = vmatprep.subr.mxu0 0.0
    %1383 = vmatpush2.msra.mxu0 0.0
    %1384 = vmatprep.subr.mxu0 0.0
    %1385 = vmatpush2.msra.mxu0 0.0
    %1386 = vmatprep.mubr.f32.mxu0 0.0
    %1387 = vmatmul.mubr.f32.gmra.mxu0 %v1311
    %v1388 = vpop.f32.mrf.mxu0
    %v1389 = vadd.f32 %v1293, %v1388
    %v1390 = vpop.f32.mrf.mxu0
    %v1391 = vadd.f32 %v1293, %v1390
    %1392 = vmatprep.mubr.f32.mxu0 0.0
    %1393 = vmatmul.mubr.f32.gmra.mxu0 %v1314
    %v1394 = vpop.f32.mrf.mxu0
    %v1395 = vadd.f32 %v1298, %v1394
    %v1396 = vpop.f32.mrf.mxu0
    %v1397 = vadd.f32 %v1298, %v1396
    %1398 = vmatprep.mubr.f32.mxu0 0.0
    %1399 = vmatmul.mubr.f32.gmra.mxu0 %v1317
    %v1400 = vpop.f32.mrf.mxu0
    %v1401 = vadd.f32 %v1303, %v1400
    %v1402 = vpop.f32.mrf.mxu0
    %v1403 = vadd.f32 %v1303, %v1402
    %1404 = vmatprep.mubr.f32.mxu0 0.0
    %1405 = vmatmul.mubr.f32.gmra.mxu0 %v1320
    %v1406 = vpop.f32.mrf.mxu0
    %v1407 = vadd.f32 %v1308, %v1406
    %v1408 = vpop.f32.mrf.mxu0
    %v1409 = vadd.f32 %v1308, %v1408
    %1410 = vdwg.mxu0
    %1411 = vmatprep.subr.mxu0 0.0
    %1412 = vmatpush1.msra.mxu0 0.0
    %1413 = vmatprep.subr.mxu0 0.0
    %1414 = vmatpush1.msra.mxu0 0.0
    %1415 = vmatprep.subr.mxu0 0.0
    %1416 = vmatpush1.msra.mxu0 0.0
    %1417 = vmatprep.subr.mxu0 0.0
    %1418 = vmatpush1.msra.mxu0 0.0
    %1419 = vmatprep.subr.mxu0 0.0
    %1420 = vmatpush1.msra.mxu0 0.0
    %1421 = vmatprep.subr.mxu0 0.0
    %1422 = vmatpush1.msra.mxu0 0.0
    %1423 = vmatprep.subr.mxu0 0.0
    %1424 = vmatpush1.msra.mxu0 0.0
    %1425 = vmatprep.subr.mxu0 0.0
    %1426 = vmatpush1.msra.mxu0 0.0
    %1427 = vmatprep.subr.mxu0 0.0
    %1428 = vmatpush1.msra.mxu0 0.0
    %1429 = vmatprep.subr.mxu0 0.0
    %1430 = vmatpush1.msra.mxu0 0.0
    %1431 = vmatprep.subr.mxu0 0.0
    %1432 = vmatpush1.msra.mxu0 0.0
    %1433 = vmatprep.subr.mxu0 0.0
    %1434 = vmatpush1.msra.mxu0 0.0
    %1435 = vmatprep.subr.mxu0 0.0
    %1436 = vmatpush1.msra.mxu0 0.0
    %1437 = vmatprep.subr.mxu0 0.0
    %1438 = vmatpush1.msra.mxu0 0.0
    %1439 = vmatprep.subr.mxu0 %v1281
    %1440 = vmatpush1.msra.mxu0 %v1280
    %1441 = vmatprep.subr.mxu0 %v1277
    %1442 = vmatpush1.msra.mxu0 %v1276
    %1443 = vmatprep.subr.mxu0 0.0
    %1444 = vmatpush2.msra.mxu0 0.0
    %1445 = vmatprep.subr.mxu0 0.0
    %1446 = vmatpush2.msra.mxu0 0.0
    %1447 = vmatprep.subr.mxu0 0.0
    %1448 = vmatpush2.msra.mxu0 0.0
    %1449 = vmatprep.subr.mxu0 0.0
    %1450 = vmatpush2.msra.mxu0 0.0
    %1451 = vmatprep.subr.mxu0 0.0
    %1452 = vmatpush2.msra.mxu0 0.0
    %1453 = vmatprep.subr.mxu0 0.0
    %1454 = vmatpush2.msra.mxu0 0.0
    %1455 = vmatprep.subr.mxu0 0.0
    %1456 = vmatpush2.msra.mxu0 0.0
    %1457 = vmatprep.subr.mxu0 0.0
    %1458 = vmatpush2.msra.mxu0 0.0
    %1459 = vmatprep.subr.mxu0 0.0
    %1460 = vmatpush2.msra.mxu0 0.0
    %1461 = vmatprep.subr.mxu0 0.0
    %1462 = vmatpush2.msra.mxu0 0.0
    %1463 = vmatprep.subr.mxu0 0.0
    %1464 = vmatpush2.msra.mxu0 0.0
    %1465 = vmatprep.subr.mxu0 0.0
    %1466 = vmatpush2.msra.mxu0 0.0
    %1467 = vmatprep.subr.mxu0 0.0
    %1468 = vmatpush2.msra.mxu0 0.0
    %1469 = vmatprep.subr.mxu0 0.0
    %1470 = vmatpush2.msra.mxu0 0.0
    %1471 = vmatprep.subr.mxu0 0.0
    %1472 = vmatpush2.msra.mxu0 0.0
    %1473 = vmatprep.subr.mxu0 0.0
    %1474 = vmatpush2.msra.mxu0 0.0
    %1475 = vmatprep.mubr.f32.mxu0 0.0
    %1476 = vmatmul.mubr.f32.gmra.mxu0 %v1311
    %v1477 = vpop.f32.mrf.mxu0
    %v1478 = vadd.f32 %v1293, %v1477
    %v1479 = vpop.f32.mrf.mxu0
    %v1480 = vadd.f32 %v1293, %v1479
    %1481 = vmatprep.mubr.f32.mxu0 0.0
    %1482 = vmatmul.mubr.f32.gmra.mxu0 %v1314
    %v1483 = vpop.f32.mrf.mxu0
    %v1484 = vadd.f32 %v1298, %v1483
    %v1485 = vpop.f32.mrf.mxu0
    %v1486 = vadd.f32 %v1298, %v1485
    %1487 = vmatprep.mubr.f32.mxu0 0.0
    %1488 = vmatmul.mubr.f32.gmra.mxu0 %v1317
    %v1489 = vpop.f32.mrf.mxu0
    %v1490 = vadd.f32 %v1303, %v1489
    %v1491 = vpop.f32.mrf.mxu0
    %v1492 = vadd.f32 %v1303, %v1491
    %1493 = vmatprep.mubr.f32.mxu0 0.0
    %1494 = vmatmul.mubr.f32.gmra.mxu0 %v1320
    %v1495 = vpop.f32.mrf.mxu0
    %v1496 = vadd.f32 %v1308, %v1495
    %v1497 = vpop.f32.mrf.mxu0
    %v1498 = vadd.f32 %v1308, %v1497
    %1499 = vdwg.mxu0
    %v1500 = vmax.f32 %v1389, 0.0
    %v1501 = vmax.f32 %v1391, 0.0
    %v1502 = vmax.f32 %v1478, 0.0
    %v1503 = vmax.f32 %v1480, 0.0
    %v1504 = vmax.f32 %v1395, 0.0
    %v1505 = vmax.f32 %v1397, 0.0
    %v1506 = vmax.f32 %v1484, 0.0
    %v1507 = vmax.f32 %v1486, 0.0
    %v1508 = vmax.f32 %v1401, 0.0
    %v1509 = vmax.f32 %v1403, 0.0
    %v1510 = vmax.f32 %v1490, 0.0
    %v1511 = vmax.f32 %v1492, 0.0
    %v1512 = vmax.f32 %v1407, 0.0
    %v1513 = vmax.f32 %v1409, 0.0
    %v1514 = vmax.f32 %v1496, 0.0
    %v1515 = vmax.f32 %v1498, 0.0
    %v1516 = vadd.f32 %v1500, %v98
    %v1517 = vadd.f32 %v1501, %v99
    %v1518 = vadd.f32 %v1502, %v100
    %v1519 = vadd.f32 %v1503, %v101
    %v1520 = vadd.f32 %v1504, %v102
    %v1521 = vadd.f32 %v1505, %v103
    %v1522 = vadd.f32 %v1506, %v104
    %v1523 = vadd.f32 %v1507, %v105
    %v1524 = vadd.f32 %v1508, %v106
    %v1525 = vadd.f32 %v1509, %v107
    %v1526 = vadd.f32 %v1510, %v108
    %v1527 = vadd.f32 %v1511, %v109
    %v1528 = vadd.f32 %v1512, %v110
    %v1529 = vadd.f32 %v1513, %v111
    %v1530 = vadd.f32 %v1514, %v112
    %v1531 = vadd.f32 %v1515, %v113
    %1532 = vst [vmem:[#allocation11] sm:$0xff] %v1516
    %1533 = vst [vmem:[#allocation11 + $0x8] sm:$0xff] %v1517
    %1534 = vst [vmem:[#allocation11 + $0x10] sm:$0xff] %v1518
    %1535 = vst [vmem:[#allocation11 + $0x18] sm:$0xff] %v1519
    %1536 = vst [vmem:[#allocation11 + $0x20] sm:$0xff] %v1520
    %1537 = vst [vmem:[#allocation11 + $0x28] sm:$0xff] %v1521
    %1538 = vst [vmem:[#allocation11 + $0x30] sm:$0xff] %v1522
    %1539 = vst [vmem:[#allocation11 + $0x38] sm:$0xff] %v1523
    %1540 = vst [vmem:[#allocation11 + $0x40] sm:$0xff] %v1524
    %1541 = vst [vmem:[#allocation11 + $0x48] sm:$0xff] %v1525
    %1542 = vst [vmem:[#allocation11 + $0x50] sm:$0xff] %v1526
    %1543 = vst [vmem:[#allocation11 + $0x58] sm:$0xff] %v1527
    %1544 = vst [vmem:[#allocation11 + $0x60] sm:$0xff] %v1528
    %1545 = vst [vmem:[#allocation11 + $0x68] sm:$0xff] %v1529
    %1546 = vst [vmem:[#allocation11 + $0x70] sm:$0xff] %v1530
    %1547 = vst [vmem:[#allocation11 + $0x78] sm:$0xff] %v1531
    // Predicated region
    $region70: #{tpu_custom_call.1} parent=1 // pred_check
      _
    $region71: #{tpu_custom_call.1} parent=1 // pred_check_branch
      %1549 = sbr.rel (0) target = $region73
    $region72: #{tpu_custom_call.1} parent=1 // pred_region
      %s1551 = ssub.s32 2048, 2048
      %1552 = vsyncadd [#allocation5], %s1551
      %s1553 = sshll.u32 [#allocation11], 4
      %s1554 = int_to_ptr.vmem [resolvable:$true] %s1553
      %1559 = dma.vmem_to_hbm [thread:$0]  %s1554, 2048, %s13, [#allocation5], 512, 512, 32
    $region73: #{tpu_custom_call.1} parent=1 // pred_fallthru
      _
    // Predicated region
    $region74: #{tpu_custom_call.1} parent=1 // pred_check
      _
    $region75: #{tpu_custom_call.1} parent=1 // pred_check_branch
      %1561 = sbr.rel (0) target = $region77
    $region76: #{tpu_custom_call.1} parent=1 // pred_region
      %1562 = dma.done [#allocation5], 2048
    $region77: #{tpu_custom_call.1} parent=1 // pred_fallthru
      _
    %1563 = vsyncpa [#allocation4], 1
    %1564 = vsyncpa [#allocation7], 1
    %1565 = vsyncpa [#allocation10], 1
    %1566 = vsyncpa [#allocation5], 1

</llo_original>
